<compile_context>
chip_gen: v7x
topology: tpu7x:2x2x1
jax: 0.10.0
libtpu: 0.0.40
codegen_flags: <defaults>
</compile_context>

<pallas_src>
import numpy as np
import jax
import jax.numpy as jnp
from jax.experimental import pallas as pl
from jax.experimental.pallas import tpu as pltpu


def _conv_out_lens(seq_len, kernel_sizes, strides, paddings):
    lens = [seq_len]
    for k, s, p in zip(kernel_sizes, strides, paddings):
        lens.append((lens[-1] + 2 * p - k) // s + 1)
    return lens


def _vmem_capacity_bytes():
    try:
        cap = int(pltpu.get_tpu_info().vmem_capacity_bytes)
        if cap > 0:
            return cap
    except Exception:
        pass
    return 64 * 2**20   # conservative fallback (v7x per-TensorCore VMEM)


def make_cnn_pooling_kernel(batch_block, input_channels, conv_channels,
                            kernel_sizes, strides, paddings, lens, pooling):
    """Builds the Pallas kernel body, closed over the static configuration."""
    n = len(conv_channels)
    in_chs = [input_channels] + list(conv_channels[:-1])

    def kernel(*refs):
        # refs: x, (w2d_i, b_i) * n, fc_w, fc_b, out
        x_ref = refs[0]                                # (Bblk, L, C_in)        bf16
        w_refs = [refs[1 + 2 * i] for i in range(n)]   # (K_i*C_in_i, C_out_i)  bf16
        b_refs = [refs[2 + 2 * i] for i in range(n)]   # (1, C_out_i)           f32
        fc_w_ref = refs[1 + 2 * n]                     # (C_last, O_pad)        bf16
        fc_b_ref = refs[2 + 2 * n]                     # (1, O_pad)             f32
        out_ref = refs[3 + 2 * n]                      # (Bblk, O_pad)          f32

        cur = x_ref[...]                               # bf16 activations in vregs
        for i in range(n):
            K, s, p = kernel_sizes[i], strides[i], paddings[i]
            l_out = lens[i + 1]
            c_in = in_chs[i]

            # Zero-pad the length axis in vregs (bf16, no VMEM scratch round trip).
            if p > 0:
                zpad = jnp.zeros((batch_block, p, c_in), cur.dtype)
                cur = jnp.concatenate([zpad, cur, zpad], axis=1)

            # im2col: K shifted views concatenated along the channel (lane) axis,
            # tap-major / channel-minor (must match the host-side weight reshape).
            taps = []
            if s == 1:
                for k in range(K):
                    taps.append(cur[:, k:k + l_out, :])
            else:
                # Subsample via reshape (cheap move pattern) instead of a strided
                # slice of an in-vreg value.
                need = (K - 1) + s * l_out
                if need > cur.shape[1]:
                    tail = jnp.zeros((batch_block, need - cur.shape[1], c_in), cur.dtype)
                    cur = jnp.concatenate([cur, tail], axis=1)
                for k in range(K):
                    win = cur[:, k:k + s * l_out, :]
                    taps.append(win.reshape(batch_block, l_out, s, c_in)[:, :, 0, :])
            col = jnp.concatenate(taps, axis=-1)       # (Bblk, l_out, K*c_in)  bf16

            # Single MXU contraction per layer (no flatten/unflatten reshapes),
            # bf16 inputs, f32 accumulation.
            acc = jax.lax.dot_general(
                col, w_refs[i][...],
                dimension_numbers=(((2,), (0,)), ((), ())),
                preferred_element_type=jnp.float32)    # (Bblk, l_out, c_out)   f32
            h = jnp.maximum(acc + b_refs[i][...], 0.0)   # bias + ReLU (f32)

            if i < n - 1:
                cur = h.astype(jnp.bfloat16)           # bf16 between layers
            else:
                if pooling == "avg":
                    pooled = jnp.sum(h, axis=1) * (1.0 / l_out)   # f32 scale in-kernel
                else:
                    pooled = jnp.max(h, axis=1)        # ReLU'd values: zero-pad safe
                out = jnp.dot(pooled.astype(jnp.bfloat16), fc_w_ref[...],
                              preferred_element_type=jnp.float32) + fc_b_ref[...]
                out_ref[...] = out.astype(out_ref.dtype)

    return kernel


def cnn_pooling_forward(x, conv_ws, conv_bs, fc_w, fc_b, *,
                        kernel_sizes, strides, paddings, pooling="avg",
                        batch_block=None):
    """x: (B, L, C_in). conv_ws[i]: (C_out, C_in, K) (PyTorch layout). fc_w: (O, C_last)."""
    B, L, Cin = x.shape
    n = len(conv_ws)
    conv_channels = [int(w.shape[0]) for w in conv_ws]
    out_size = int(fc_w.shape[0])
    in_chs = [Cin] + conv_channels[:-1]
    lens = _conv_out_lens(L, kernel_sizes, strides, paddings)

    # Lane-dense FC output: pad output dim to a multiple of 128 (unmasked vst); the
    # padded columns are zero weights/bias and are sliced off after the call.
    o_pad = -(-out_size // 128) * 128

    # ---- VMEM-budget-driven batch block --------------------------------------
    vmem_cap = _vmem_capacity_bytes()
    per_elem = 2 * L * Cin * 2                         # double-buffered bf16 input slab
    for i in range(n):
        l_pad = lens[i] + 2 * paddings[i]
        per_elem += (l_pad * in_chs[i] * 2             # padded activations (bf16)
                     + lens[i + 1] * kernel_sizes[i] * in_chs[i] * 2  # im2col (bf16)
                     + lens[i + 1] * conv_channels[i] * (4 + 2))      # f32 acc + bf16 out
    per_elem += 2 * o_pad * 4                          # double-buffered f32 output row
    const_bytes = sum(2 * (kernel_sizes[i] * in_chs[i] * conv_channels[i] * 2
                           + conv_channels[i] * 4) for i in range(n))
    const_bytes += 2 * (conv_channels[-1] * o_pad * 2 + o_pad * 4)

    if batch_block is None:
        budget = int(0.4 * vmem_cap)                   # headroom for compiler scratch
        by_vmem = max(1, (budget - const_bytes) // max(per_elem, 1))
        min_lout = max(1, min(lens[1:]))
        by_rows = max(1, -(-2048 // min_lout))         # ~2048 im2col MXU rows per step
        batch_block = max(1, min(B, by_vmem, by_rows))
        # v7x proxy (<=96 MiB VMEM/TC, 2 TCs): keep >=2 "parallel" grid steps so both
        # TensorCores get work; on 128 MiB parts (v5e/v6e) prefer one big block.
        if vmem_cap <= 96 * 2**20 and B >= 2:
            batch_block = min(batch_block, max(1, B // 2))
    batch_block = max(1, min(batch_block, B))
    while B % batch_block != 0:
        batch_block -= 1
    Bblk = batch_block
    G = B // Bblk

    kernel = make_cnn_pooling_kernel(Bblk, Cin, conv_channels,
                                     kernel_sizes, strides, paddings, lens, pooling)

    # ---- inputs (bf16 on the HBM side for x and weights) ----------------------
    inputs = [x.astype(jnp.bfloat16)]
    for i, (w, bb) in enumerate(zip(conv_ws, conv_bs)):
        K = int(w.shape[2])
        # (C_out, C_in, K) -> (K, C_in, C_out) -> (K*C_in, C_out): tap-major rows,
        # matching the in-kernel im2col concat order.
        w2d = jnp.transpose(w, (2, 1, 0)).reshape(
            K * in_chs[i], conv_channels[i]).astype(jnp.bfloat16)
        inputs.append(w2d)
        inputs.append(bb.reshape(1, -1).astype(jnp.float32))
    fc_w_p = jnp.zeros((conv_channels[-1], o_pad), jnp.float32)
    fc_w_p = fc_w_p.at[:, :out_size].set(jnp.transpose(fc_w))
    inputs.append(fc_w_p.astype(jnp.bfloat16))
    fc_b_p = jnp.zeros((1, o_pad), jnp.float32).at[0, :out_size].set(fc_b)
    inputs.append(fc_b_p)

    vmem_limit = int(min(0.7 * vmem_cap, 112 * 2**20))

    def build(single_buffer_weights):
        # Grid-invariant operands (weights/biases) don't need double buffering.
        const_kw = dict(pipeline_mode=pl.Buffered(1)) if single_buffer_weights else {}
        in_specs = [pl.BlockSpec((Bblk, L, Cin), lambda b: (b, 0, 0))]
        for i in range(n):
            in_specs.append(pl.BlockSpec((kernel_sizes[i] * in_chs[i], conv_channels[i]),
                                         lambda b: (0, 0), **const_kw))
            in_specs.append(pl.BlockSpec((1, conv_channels[i]),
                                         lambda b: (0, 0), **const_kw))
        in_specs.append(pl.BlockSpec((conv_channels[-1], o_pad),
                                     lambda b: (0, 0), **const_kw))
        in_specs.append(pl.BlockSpec((1, o_pad), lambda b: (0, 0), **const_kw))
        return pl.pallas_call(
            kernel,
            out_shape=jax.ShapeDtypeStruct((G, Bblk, o_pad), jnp.float32),
            grid=(G,),
            in_specs=in_specs,
            out_specs=pl.BlockSpec((None, Bblk, o_pad), lambda b: (b, 0, 0)),
            compiler_params=pltpu.CompilerParams(
                dimension_semantics=("parallel",),     # independent batch blocks (2 TCs)
                vmem_limit_bytes=vmem_limit),
        )

    try:
        out3 = jax.block_until_ready(build(True)(*inputs))
    except Exception:
        # Fallback if this JAX build rejects Buffered(1) single-buffering.
        out3 = jax.block_until_ready(build(False)(*inputs))
    return out3.reshape(B, o_pad)[:, :out_size]


def ref_forward(x, conv_ws, conv_bs, fc_w, fc_b, *, strides, paddings, pooling="avg"):
    """Pure-JAX f32 reference matching PyTorch semantics."""
    h = jnp.transpose(x, (0, 2, 1))                                # (B, C, L)
    for w, b, s, p in zip(conv_ws, conv_bs, strides, paddings):
        h = jax.lax.conv_general_dilated(
            h, w, window_strides=(s,), padding=[(p, p)],
            dimension_numbers=("NCH", "OIH", "NCH"))
        h = jnp.maximum(h + b[None, :, None], 0.0)
    pooled = jnp.mean(h, axis=-1) if pooling == "avg" else jnp.max(h, axis=-1)
    return pooled @ fc_w.T + fc_b[None, :]


if __name__ == "__main__":
    # Module config: input_channels=4, conv_channels=[8, 16], kernel_sizes=[3, 5],
    # strides=[1, 1], paddings=[1, 2], output_size=3, ReLU, dropout=0.
    B, L, Cin = 4, 16, 4
    conv_channels = [8, 16]
    kernel_sizes = [3, 5]
    strides = [1, 1]
    paddings = [k // 2 for k in kernel_sizes]
    out_size = 3

    key = jax.random.PRNGKey(0)
    ks = jax.random.split(key, 2 * len(conv_channels) + 3)

    # Deterministic PyTorch-default-style uniform init.
    conv_ws, conv_bs = [], []
    in_ch = Cin
    for i, (out_ch, k) in enumerate(zip(conv_channels, kernel_sizes)):
        bound = 1.0 / np.sqrt(in_ch * k)
        conv_ws.append(jax.random.uniform(ks[2 * i], (out_ch, in_ch, k),
                                          jnp.float32, -bound, bound))
        conv_bs.append(jax.random.uniform(ks[2 * i + 1], (out_ch,),
                                          jnp.float32, -bound, bound))
        in_ch = out_ch
    fb = 1.0 / np.sqrt(conv_channels[-1])
    fc_w = jax.random.uniform(ks[-3], (out_size, conv_channels[-1]),
                              jnp.float32, -fb, fb)
    fc_b = jax.random.uniform(ks[-2], (out_size,), jnp.float32, -fb, fb)
    x = jax.random.normal(ks[-1], (B, L, Cin), jnp.float32)

    # avg pooling with auto batch block, max pooling with Bblk=2 (multi-step grid path).
    for pooling, bblk in (("avg", None), ("max", 2)):
        out = cnn_pooling_forward(x, conv_ws, conv_bs, fc_w, fc_b,
                                  kernel_sizes=kernel_sizes, strides=strides,
                                  paddings=paddings, pooling=pooling,
                                  batch_block=bblk)
        out = jax.block_until_ready(out)
        ref = ref_forward(x, conv_ws, conv_bs, fc_w, fc_b,
                          strides=strides, paddings=paddings, pooling=pooling)
        # bf16 matmul inputs -> loosened tolerance vs the f32 reference.
        np.testing.assert_allclose(np.asarray(out), np.asarray(ref),
                                   rtol=5e-2, atol=2e-2)

    print("KERNEL_OK")
</pallas_src>

<mosaic_0001>
module attributes {stable_mosaic.version = 11 : i64} {
  func.func @kernel(%arg0: i32, %arg1: memref<2x16x4xbf16, #tpu.memory_space<vmem>>, %arg2: memref<12x8xbf16, #tpu.memory_space<vmem>>, %arg3: memref<1x8xf32, #tpu.memory_space<vmem>>, %arg4: memref<40x16xbf16, #tpu.memory_space<vmem>>, %arg5: memref<1x16xf32, #tpu.memory_space<vmem>>, %arg6: memref<16x128xbf16, #tpu.memory_space<vmem>>, %arg7: memref<1x128xf32, #tpu.memory_space<vmem>>, %arg8: memref<1x2x128xf32, #tpu.memory_space<vmem>>) attributes {dimension_semantics = [#tpu.dimension_semantics<parallel>], iteration_bounds = array<i64: 2>, scalar_prefetch = 0 : i64, scratch_operands = 0 : i64, tpu.core_type = #tpu.core_type<tc>, window_params = [{transform_indices = @transform_0, window_bounds = array<i64: 2, 16, 4>}, {pipeline_mode = #tpu.pipeline_mode<synchronous>, transform_indices = @transform_1, window_bounds = array<i64: 12, 8>}, {pipeline_mode = #tpu.pipeline_mode<synchronous>, transform_indices = @transform_2, window_bounds = array<i64: 1, 8>}, {pipeline_mode = #tpu.pipeline_mode<synchronous>, transform_indices = @transform_3, window_bounds = array<i64: 40, 16>}, {pipeline_mode = #tpu.pipeline_mode<synchronous>, transform_indices = @transform_4, window_bounds = array<i64: 1, 16>}, {pipeline_mode = #tpu.pipeline_mode<synchronous>, transform_indices = @transform_5, window_bounds = array<i64: 16, 128>}, {pipeline_mode = #tpu.pipeline_mode<synchronous>, transform_indices = @transform_6, window_bounds = array<i64: 1, 128>}, {transform_indices = @transform_7, window_bounds = array<i64: 1, 2, 128>}]} {
    %c0 = arith.constant 0 : index
    %c0_0 = arith.constant 0 : index
    %c0_1 = arith.constant 0 : index
    %0 = vector.load %arg1[%c0, %c0_0, %c0_1] : memref<2x16x4xbf16, #tpu.memory_space<vmem>>, vector<2x16x4xbf16>
    %cst = arith.constant 0.000000e+00 : bf16
    %1 = vector.broadcast %cst : bf16 to vector<2x1x4xbf16>
    %2 = tpu.concatenate %1, %0, %1 in 1 : vector<2x1x4xbf16>, vector<2x16x4xbf16>, vector<2x1x4xbf16> -> vector<2x18x4xbf16>
    %3 = vector.extract_strided_slice %2 {offsets = [0, 0, 0], sizes = [2, 16, 4], strides = [1, 1, 1]} : vector<2x18x4xbf16> to vector<2x16x4xbf16>
    %4 = vector.extract_strided_slice %2 {offsets = [0, 1, 0], sizes = [2, 16, 4], strides = [1, 1, 1]} : vector<2x18x4xbf16> to vector<2x16x4xbf16>
    %5 = vector.extract_strided_slice %2 {offsets = [0, 2, 0], sizes = [2, 16, 4], strides = [1, 1, 1]} : vector<2x18x4xbf16> to vector<2x16x4xbf16>
    %6 = tpu.concatenate %3, %4, %5 in 2 : vector<2x16x4xbf16>, vector<2x16x4xbf16>, vector<2x16x4xbf16> -> vector<2x16x12xbf16>
    %c0_2 = arith.constant 0 : index
    %c0_3 = arith.constant 0 : index
    %7 = vector.load %arg2[%c0_2, %c0_3] : memref<12x8xbf16, #tpu.memory_space<vmem>>, vector<12x8xbf16>
    %cst_4 = arith.constant dense<0.000000e+00> : vector<2x16x8xf32>
    %8 = tpu.matmul %6, %7, %cst_4 {dimension_numbers = #tpu.dot_dimension_numbers<[2], [0], [0, 1], [1], [0, 0, 0, 1, 1, 1], [], []>} : vector<2x16x12xbf16>, vector<12x8xbf16>, vector<2x16x8xf32> -> vector<2x16x8xf32>
    %c0_5 = arith.constant 0 : index
    %c0_6 = arith.constant 0 : index
    %9 = vector.load %arg3[%c0_5, %c0_6] : memref<1x8xf32, #tpu.memory_space<vmem>>, vector<1x8xf32>
    %10 = vector.shape_cast %9 : vector<1x8xf32> to vector<1x1x8xf32>
    %11 = vector.broadcast %10 : vector<1x1x8xf32> to vector<2x16x8xf32>
    %12 = arith.addf %8, %11 : vector<2x16x8xf32>
    %cst_7 = arith.constant 0.000000e+00 : f32
    %13 = vector.broadcast %cst_7 : f32 to vector<2x16x8xf32>
    %14 = arith.maximumf %12, %13 : vector<2x16x8xf32>
    %15 = arith.truncf %14 : vector<2x16x8xf32> to vector<2x16x8xbf16>
    %cst_8 = arith.constant 0.000000e+00 : bf16
    %16 = vector.broadcast %cst_8 : bf16 to vector<2x2x8xbf16>
    %17 = tpu.concatenate %16, %15, %16 in 1 : vector<2x2x8xbf16>, vector<2x16x8xbf16>, vector<2x2x8xbf16> -> vector<2x20x8xbf16>
    %18 = vector.extract_strided_slice %17 {offsets = [0, 0, 0], sizes = [2, 16, 8], strides = [1, 1, 1]} : vector<2x20x8xbf16> to vector<2x16x8xbf16>
    %19 = vector.extract_strided_slice %17 {offsets = [0, 1, 0], sizes = [2, 16, 8], strides = [1, 1, 1]} : vector<2x20x8xbf16> to vector<2x16x8xbf16>
    %20 = vector.extract_strided_slice %17 {offsets = [0, 2, 0], sizes = [2, 16, 8], strides = [1, 1, 1]} : vector<2x20x8xbf16> to vector<2x16x8xbf16>
    %21 = vector.extract_strided_slice %17 {offsets = [0, 3, 0], sizes = [2, 16, 8], strides = [1, 1, 1]} : vector<2x20x8xbf16> to vector<2x16x8xbf16>
    %22 = vector.extract_strided_slice %17 {offsets = [0, 4, 0], sizes = [2, 16, 8], strides = [1, 1, 1]} : vector<2x20x8xbf16> to vector<2x16x8xbf16>
    %23 = tpu.concatenate %18, %19, %20, %21, %22 in 2 : vector<2x16x8xbf16>, vector<2x16x8xbf16>, vector<2x16x8xbf16>, vector<2x16x8xbf16>, vector<2x16x8xbf16> -> vector<2x16x40xbf16>
    %c0_9 = arith.constant 0 : index
    %c0_10 = arith.constant 0 : index
    %24 = vector.load %arg4[%c0_9, %c0_10] : memref<40x16xbf16, #tpu.memory_space<vmem>>, vector<40x16xbf16>
    %cst_11 = arith.constant dense<0.000000e+00> : vector<2x16x16xf32>
    %25 = tpu.matmul %23, %24, %cst_11 {dimension_numbers = #tpu.dot_dimension_numbers<[2], [0], [0, 1], [1], [0, 0, 0, 1, 1, 1], [], []>} : vector<2x16x40xbf16>, vector<40x16xbf16>, vector<2x16x16xf32> -> vector<2x16x16xf32>
    %c0_12 = arith.constant 0 : index
    %c0_13 = arith.constant 0 : index
    %26 = vector.load %arg5[%c0_12, %c0_13] : memref<1x16xf32, #tpu.memory_space<vmem>>, vector<1x16xf32>
    %27 = vector.shape_cast %26 : vector<1x16xf32> to vector<1x1x16xf32>
    %28 = vector.broadcast %27 : vector<1x1x16xf32> to vector<2x16x16xf32>
    %29 = arith.addf %25, %28 : vector<2x16x16xf32>
    %cst_14 = arith.constant 0.000000e+00 : f32
    %30 = vector.broadcast %cst_14 : f32 to vector<2x16x16xf32>
    %31 = arith.maximumf %29, %30 : vector<2x16x16xf32>
    %cst_15 = arith.constant dense<0.000000e+00> : vector<2x16xf32>
    %32 = vector.multi_reduction <add>, %31, %cst_15 [1] : vector<2x16x16xf32> to vector<2x16xf32>
    %cst_16 = arith.constant 6.250000e-02 : f32
    %33 = vector.broadcast %cst_16 : f32 to vector<2x16xf32>
    %34 = arith.mulf %32, %33 : vector<2x16xf32>
    %35 = arith.truncf %34 : vector<2x16xf32> to vector<2x16xbf16>
    %c0_17 = arith.constant 0 : index
    %c0_18 = arith.constant 0 : index
    %36 = vector.load %arg6[%c0_17, %c0_18] : memref<16x128xbf16, #tpu.memory_space<vmem>>, vector<16x128xbf16>
    %cst_19 = arith.constant dense<0.000000e+00> : vector<2x128xf32>
    %37 = tpu.matmul %35, %36, %cst_19 {dimension_numbers = #tpu.dot_dimension_numbers<[1], [0], [0], [1], [0, 0, 1, 1], [], []>} : vector<2x16xbf16>, vector<16x128xbf16>, vector<2x128xf32> -> vector<2x128xf32>
    %c0_20 = arith.constant 0 : index
    %c0_21 = arith.constant 0 : index
    %38 = vector.load %arg7[%c0_20, %c0_21] : memref<1x128xf32, #tpu.memory_space<vmem>>, vector<1x128xf32>
    %39 = vector.broadcast %38 : vector<1x128xf32> to vector<2x128xf32>
    %40 = arith.addf %37, %39 : vector<2x128xf32>
    %c0_22 = arith.constant 0 : index
    %c0_23 = arith.constant 0 : index
    %c0_24 = arith.constant 0 : index
    %41 = vector.load %arg8[%c0_22, %c0_23, %c0_24] : memref<1x2x128xf32, #tpu.memory_space<vmem>>, vector<1x2x128xf32>
    %42 = vector.shape_cast %41 : vector<1x2x128xf32> to vector<2x128xf32>
    %43 = vector.shape_cast %40 : vector<2x128xf32> to vector<1x2x128xf32>
    tpu.vector_store %arg8[%c0_22, %c0_23, %c0_24], %43 {strides = array<i32>} : memref<1x2x128xf32, #tpu.memory_space<vmem>>, vector<1x2x128xf32>,
    return
  }
  func.func @transform_0(%arg0: i32) -> (i32, i32, i32) {
    %c0_i32 = arith.constant 0 : i32
    %c0_i32_0 = arith.constant 0 : i32
    %c0_i32_1 = arith.constant 0 : i32
    return %arg0, %c0_i32, %c0_i32_0 : i32, i32, i32
  }
  func.func @transform_1(%arg0: i32) -> (i32, i32) {
    %c0_i32 = arith.constant 0 : i32
    %c0_i32_0 = arith.constant 0 : i32
    %c0_i32_1 = arith.constant 0 : i32
    return %c0_i32, %c0_i32_0 : i32, i32
  }
  func.func @transform_2(%arg0: i32) -> (i32, i32) {
    %c0_i32 = arith.constant 0 : i32
    %c0_i32_0 = arith.constant 0 : i32
    %c0_i32_1 = arith.constant 0 : i32
    return %c0_i32, %c0_i32_0 : i32, i32
  }
  func.func @transform_3(%arg0: i32) -> (i32, i32) {
    %c0_i32 = arith.constant 0 : i32
    %c0_i32_0 = arith.constant 0 : i32
    %c0_i32_1 = arith.constant 0 : i32
    return %c0_i32, %c0_i32_0 : i32, i32
  }
  func.func @transform_4(%arg0: i32) -> (i32, i32) {
    %c0_i32 = arith.constant 0 : i32
    %c0_i32_0 = arith.constant 0 : i32
    %c0_i32_1 = arith.constant 0 : i32
    return %c0_i32, %c0_i32_0 : i32, i32
  }
  func.func @transform_5(%arg0: i32) -> (i32, i32) {
    %c0_i32 = arith.constant 0 : i32
    %c0_i32_0 = arith.constant 0 : i32
    %c0_i32_1 = arith.constant 0 : i32
    return %c0_i32, %c0_i32_0 : i32, i32
  }
  func.func @transform_6(%arg0: i32) -> (i32, i32) {
    %c0_i32 = arith.constant 0 : i32
    %c0_i32_0 = arith.constant 0 : i32
    %c0_i32_1 = arith.constant 0 : i32
    return %c0_i32, %c0_i32_0 : i32, i32
  }
  func.func @transform_7(%arg0: i32) -> (i32, i32, i32) {
    %c0_i32 = arith.constant 0 : i32
    %c0_i32_0 = arith.constant 0 : i32
    %c0_i32_1 = arith.constant 0 : i32
    return %arg0, %c0_i32, %c0_i32_0 : i32, i32, i32
  }
}

module attributes {stable_mosaic.version = 11 : i64} {
  func.func @kernel(%arg0: i32, %arg1: memref<2x16x4xbf16, #tpu.memory_space<vmem>>, %arg2: memref<12x8xbf16, #tpu.memory_space<vmem>>, %arg3: memref<1x8xf32, #tpu.memory_space<vmem>>, %arg4: memref<40x16xbf16, #tpu.memory_space<vmem>>, %arg5: memref<1x16xf32, #tpu.memory_space<vmem>>, %arg6: memref<16x128xbf16, #tpu.memory_space<vmem>>, %arg7: memref<1x128xf32, #tpu.memory_space<vmem>>, %arg8: memref<1x2x128xf32, #tpu.memory_space<vmem>>) attributes {dimension_semantics = [#tpu.dimension_semantics<parallel>], iteration_bounds = array<i64: 2>, scalar_prefetch = 0 : i64, scratch_operands = 0 : i64, tpu.core_type = #tpu.core_type<tc>, window_params = [{transform_indices = @transform_0, window_bounds = array<i64: 2, 16, 4>}, {pipeline_mode = #tpu.pipeline_mode<synchronous>, transform_indices = @transform_1, window_bounds = array<i64: 12, 8>}, {pipeline_mode = #tpu.pipeline_mode<synchronous>, transform_indices = @transform_2, window_bounds = array<i64: 1, 8>}, {pipeline_mode = #tpu.pipeline_mode<synchronous>, transform_indices = @transform_3, window_bounds = array<i64: 40, 16>}, {pipeline_mode = #tpu.pipeline_mode<synchronous>, transform_indices = @transform_4, window_bounds = array<i64: 1, 16>}, {pipeline_mode = #tpu.pipeline_mode<synchronous>, transform_indices = @transform_5, window_bounds = array<i64: 16, 128>}, {pipeline_mode = #tpu.pipeline_mode<synchronous>, transform_indices = @transform_6, window_bounds = array<i64: 1, 128>}, {transform_indices = @transform_7, window_bounds = array<i64: 1, 2, 128>}]} {
    %c0 = arith.constant 0 : index
    %c0_0 = arith.constant 0 : index
    %c0_1 = arith.constant 0 : index
    %0 = vector.load %arg1[%c0, %c0_0, %c0_1] : memref<2x16x4xbf16, #tpu.memory_space<vmem>>, vector<2x16x4xbf16>
    %cst = arith.constant 0.000000e+00 : bf16
    %1 = vector.broadcast %cst : bf16 to vector<2x1x4xbf16>
    %2 = tpu.concatenate %1, %0, %1 in 1 : vector<2x1x4xbf16>, vector<2x16x4xbf16>, vector<2x1x4xbf16> -> vector<2x18x4xbf16>
    %3 = vector.extract_strided_slice %2 {offsets = [0, 0, 0], sizes = [2, 16, 4], strides = [1, 1, 1]} : vector<2x18x4xbf16> to vector<2x16x4xbf16>
    %4 = vector.extract_strided_slice %2 {offsets = [0, 1, 0], sizes = [2, 16, 4], strides = [1, 1, 1]} : vector<2x18x4xbf16> to vector<2x16x4xbf16>
    %5 = vector.extract_strided_slice %2 {offsets = [0, 2, 0], sizes = [2, 16, 4], strides = [1, 1, 1]} : vector<2x18x4xbf16> to vector<2x16x4xbf16>
    %6 = tpu.concatenate %3, %4, %5 in 2 : vector<2x16x4xbf16>, vector<2x16x4xbf16>, vector<2x16x4xbf16> -> vector<2x16x12xbf16>
    %c0_2 = arith.constant 0 : index
    %c0_3 = arith.constant 0 : index
    %7 = vector.load %arg2[%c0_2, %c0_3] : memref<12x8xbf16, #tpu.memory_space<vmem>>, vector<12x8xbf16>
    %cst_4 = arith.constant dense<0.000000e+00> : vector<2x16x8xf32>
    %8 = tpu.matmul %6, %7, %cst_4 {dimension_numbers = #tpu.dot_dimension_numbers<[2], [0], [0, 1], [1], [0, 0, 0, 1, 1, 1], [], []>} : vector<2x16x12xbf16>, vector<12x8xbf16>, vector<2x16x8xf32> -> vector<2x16x8xf32>
    %c0_5 = arith.constant 0 : index
    %c0_6 = arith.constant 0 : index
    %9 = vector.load %arg3[%c0_5, %c0_6] : memref<1x8xf32, #tpu.memory_space<vmem>>, vector<1x8xf32>
    %10 = vector.shape_cast %9 : vector<1x8xf32> to vector<1x1x8xf32>
    %11 = vector.broadcast %10 : vector<1x1x8xf32> to vector<2x16x8xf32>
    %12 = arith.addf %8, %11 : vector<2x16x8xf32>
    %cst_7 = arith.constant 0.000000e+00 : f32
    %13 = vector.broadcast %cst_7 : f32 to vector<2x16x8xf32>
    %14 = arith.maximumf %12, %13 : vector<2x16x8xf32>
    %15 = arith.truncf %14 : vector<2x16x8xf32> to vector<2x16x8xbf16>
    %cst_8 = arith.constant 0.000000e+00 : bf16
    %16 = vector.broadcast %cst_8 : bf16 to vector<2x2x8xbf16>
    %17 = tpu.concatenate %16, %15, %16 in 1 : vector<2x2x8xbf16>, vector<2x16x8xbf16>, vector<2x2x8xbf16> -> vector<2x20x8xbf16>
    %18 = vector.extract_strided_slice %17 {offsets = [0, 0, 0], sizes = [2, 16, 8], strides = [1, 1, 1]} : vector<2x20x8xbf16> to vector<2x16x8xbf16>
    %19 = vector.extract_strided_slice %17 {offsets = [0, 1, 0], sizes = [2, 16, 8], strides = [1, 1, 1]} : vector<2x20x8xbf16> to vector<2x16x8xbf16>
    %20 = vector.extract_strided_slice %17 {offsets = [0, 2, 0], sizes = [2, 16, 8], strides = [1, 1, 1]} : vector<2x20x8xbf16> to vector<2x16x8xbf16>
    %21 = vector.extract_strided_slice %17 {offsets = [0, 3, 0], sizes = [2, 16, 8], strides = [1, 1, 1]} : vector<2x20x8xbf16> to vector<2x16x8xbf16>
    %22 = vector.extract_strided_slice %17 {offsets = [0, 4, 0], sizes = [2, 16, 8], strides = [1, 1, 1]} : vector<2x20x8xbf16> to vector<2x16x8xbf16>
    %23 = tpu.concatenate %18, %19, %20, %21, %22 in 2 : vector<2x16x8xbf16>, vector<2x16x8xbf16>, vector<2x16x8xbf16>, vector<2x16x8xbf16>, vector<2x16x8xbf16> -> vector<2x16x40xbf16>
    %c0_9 = arith.constant 0 : index
    %c0_10 = arith.constant 0 : index
    %24 = vector.load %arg4[%c0_9, %c0_10] : memref<40x16xbf16, #tpu.memory_space<vmem>>, vector<40x16xbf16>
    %cst_11 = arith.constant dense<0.000000e+00> : vector<2x16x16xf32>
    %25 = tpu.matmul %23, %24, %cst_11 {dimension_numbers = #tpu.dot_dimension_numbers<[2], [0], [0, 1], [1], [0, 0, 0, 1, 1, 1], [], []>} : vector<2x16x40xbf16>, vector<40x16xbf16>, vector<2x16x16xf32> -> vector<2x16x16xf32>
    %c0_12 = arith.constant 0 : index
    %c0_13 = arith.constant 0 : index
    %26 = vector.load %arg5[%c0_12, %c0_13] : memref<1x16xf32, #tpu.memory_space<vmem>>, vector<1x16xf32>
    %27 = vector.shape_cast %26 : vector<1x16xf32> to vector<1x1x16xf32>
    %28 = vector.broadcast %27 : vector<1x1x16xf32> to vector<2x16x16xf32>
    %29 = arith.addf %25, %28 : vector<2x16x16xf32>
    %cst_14 = arith.constant 0.000000e+00 : f32
    %30 = vector.broadcast %cst_14 : f32 to vector<2x16x16xf32>
    %31 = arith.maximumf %29, %30 : vector<2x16x16xf32>
    %cst_15 = arith.constant dense<0.000000e+00> : vector<2x16xf32>
    %32 = vector.multi_reduction <add>, %31, %cst_15 [1] : vector<2x16x16xf32> to vector<2x16xf32>
    %cst_16 = arith.constant 6.250000e-02 : f32
    %33 = vector.broadcast %cst_16 : f32 to vector<2x16xf32>
    %34 = arith.mulf %32, %33 : vector<2x16xf32>
    %35 = arith.truncf %34 : vector<2x16xf32> to vector<2x16xbf16>
    %c0_17 = arith.constant 0 : index
    %c0_18 = arith.constant 0 : index
    %36 = vector.load %arg6[%c0_17, %c0_18] : memref<16x128xbf16, #tpu.memory_space<vmem>>, vector<16x128xbf16>
    %cst_19 = arith.constant dense<0.000000e+00> : vector<2x128xf32>
    %37 = tpu.matmul %35, %36, %cst_19 {dimension_numbers = #tpu.dot_dimension_numbers<[1], [0], [0], [1], [0, 0, 1, 1], [], []>} : vector<2x16xbf16>, vector<16x128xbf16>, vector<2x128xf32> -> vector<2x128xf32>
    %c0_20 = arith.constant 0 : index
    %c0_21 = arith.constant 0 : index
    %38 = vector.load %arg7[%c0_20, %c0_21] : memref<1x128xf32, #tpu.memory_space<vmem>>, vector<1x128xf32>
    %39 = vector.broadcast %38 : vector<1x128xf32> to vector<2x128xf32>
    %40 = arith.addf %37, %39 : vector<2x128xf32>
    %c0_22 = arith.constant 0 : index
    %c0_23 = arith.constant 0 : index
    %c0_24 = arith.constant 0 : index
    %41 = vector.load %arg8[%c0_22, %c0_23, %c0_24] : memref<1x2x128xf32, #tpu.memory_space<vmem>>, vector<1x2x128xf32>
    %42 = vector.shape_cast %41 : vector<1x2x128xf32> to vector<2x128xf32>
    %43 = vector.shape_cast %40 : vector<2x128xf32> to vector<1x2x128xf32>
    tpu.vector_store %arg8[%c0_22, %c0_23, %c0_24], %43 {strides = array<i32>} : memref<1x2x128xf32, #tpu.memory_space<vmem>>, vector<1x2x128xf32>,
    return
  }
  func.func @transform_0(%arg0: i32) -> (i32, i32, i32) {
    %c0_i32 = arith.constant 0 : i32
    %c0_i32_0 = arith.constant 0 : i32
    %c0_i32_1 = arith.constant 0 : i32
    return %arg0, %c0_i32, %c0_i32_0 : i32, i32, i32
  }
  func.func @transform_1(%arg0: i32) -> (i32, i32) {
    %c0_i32 = arith.constant 0 : i32
    %c0_i32_0 = arith.constant 0 : i32
    %c0_i32_1 = arith.constant 0 : i32
    return %c0_i32, %c0_i32_0 : i32, i32
  }
  func.func @transform_2(%arg0: i32) -> (i32, i32) {
    %c0_i32 = arith.constant 0 : i32
    %c0_i32_0 = arith.constant 0 : i32
    %c0_i32_1 = arith.constant 0 : i32
    return %c0_i32, %c0_i32_0 : i32, i32
  }
  func.func @transform_3(%arg0: i32) -> (i32, i32) {
    %c0_i32 = arith.constant 0 : i32
    %c0_i32_0 = arith.constant 0 : i32
    %c0_i32_1 = arith.constant 0 : i32
    return %c0_i32, %c0_i32_0 : i32, i32
  }
  func.func @transform_4(%arg0: i32) -> (i32, i32) {
    %c0_i32 = arith.constant 0 : i32
    %c0_i32_0 = arith.constant 0 : i32
    %c0_i32_1 = arith.constant 0 : i32
    return %c0_i32, %c0_i32_0 : i32, i32
  }
  func.func @transform_5(%arg0: i32) -> (i32, i32) {
    %c0_i32 = arith.constant 0 : i32
    %c0_i32_0 = arith.constant 0 : i32
    %c0_i32_1 = arith.constant 0 : i32
    return %c0_i32, %c0_i32_0 : i32, i32
  }
  func.func @transform_6(%arg0: i32) -> (i32, i32) {
    %c0_i32 = arith.constant 0 : i32
    %c0_i32_0 = arith.constant 0 : i32
    %c0_i32_1 = arith.constant 0 : i32
    return %c0_i32, %c0_i32_0 : i32, i32
  }
  func.func @transform_7(%arg0: i32) -> (i32, i32, i32) {
    %c0_i32 = arith.constant 0 : i32
    %c0_i32_0 = arith.constant 0 : i32
    %c0_i32_1 = arith.constant 0 : i32
    return %arg0, %c0_i32, %c0_i32_0 : i32, i32, i32
  }
}

</mosaic_0001>

<llo_original>
// kernel: tpu_custom_call.1
$region0: #{tpu_custom_call.1}
  #allocation0 [shape = 'u32[]', space=smem, size = 0x4, offset = 0x4, fixed_abs, tag = 'smem constant byte address 0x4 - core index']
  #allocation1 [shape = 'u32[144,128]{1,0:T(1,128)}', space=vmem, size = 0x12000, scoped, tag = 'internal scratch']
  %s0 = inlined_call_operand.vmem [shape: bf16[4,16,4], index: 0, kind: input, shape index: {}]
  %s1 = inlined_call_operand.vmem [shape: bf16[12,8], index: 1, kind: input, shape index: {}]
  %s2 = inlined_call_operand.vmem [shape: f32[1,8], index: 2, kind: input, shape index: {}]
  %s3 = inlined_call_operand.vmem [shape: bf16[40,16], index: 3, kind: input, shape index: {}]
  %s4 = inlined_call_operand.vmem [shape: f32[1,16], index: 4, kind: input, shape index: {}]
  %s5 = inlined_call_operand.vmem [shape: bf16[16,128], index: 5, kind: input, shape index: {}]
  %s6 = inlined_call_operand.vmem [shape: f32[1,128], index: 6, kind: input, shape index: {}]
  %s7 = inlined_call_operand.hbm [shape: f32[2,2,128], index: 7, kind: output, shape index: {}]
  %s8 = sld [smem:[#allocation0]]
  $region61: #{tpu_custom_call.1} parent=0
    _
  %s10 = ssub.s32 1, %s8
  %s11 = scalar_select 0, %s10, %s8
  $region1: #{tpu_custom_call.1} parent=0
    #allocation2 [shape = 'u8[2048]{0}', space=vmem, size = 0x800, scoped, tag = 'output window, operand 0']
    #allocation3 [shape = 's32[2]{0}', space=sflag, size = 0x8, scoped, tag = 'scoped memory for tpu_custom_call.1']
    %12 = vsyncpa [#allocation3], 0
    %s13 = scalar_lea.sflag [#allocation3], 1
    %14 = vsyncpa %s13, 0
    loop: start=0, step=1, limit=4
    $region2: #{tpu_custom_call.1} parent=1 // loop_pre_header
      _
    $region3: #{tpu_custom_call.1} parent=1 // loop_header
      %s16 = sphi 0, %s20
      %p17 = scmp.ge.s32.totalorder %s16, 4
      %s26 = sphi 0, %s28
      %s29 = sphi 0, %s26
      %s30 = sphi 0, %s29
      %s46 = sphi 0, %s30
      %s50 = sphi 0, %s50
      %s52 = sphi 0, %s50
      %s53 = sphi 0, %s52
      %s67 = sphi 0, %s53
      %s71 = sphi 0, %s71
      %s73 = sphi 0, %s71
      %s74 = sphi 0, %s73
      %s88 = sphi 0, %s74
      %s92 = sphi 0, %s92
      %s94 = sphi 0, %s92
      %s95 = sphi 0, %s94
      %s109 = sphi 0, %s95
      %s113 = sphi 0, %s113
      %s115 = sphi 0, %s113
      %s116 = sphi 0, %s115
      %s130 = sphi 0, %s116
      %s134 = sphi 0, %s134
      %s136 = sphi 0, %s134
      %s137 = sphi 0, %s136
      %s151 = sphi 0, %s137
      %s155 = sphi 0, %s155
      %s157 = sphi 0, %s155
      %s158 = sphi 0, %s157
      %s172 = sphi 0, %s158
      %s178 = sphi 0, %s180
      %s181 = sphi 0, %s178
      %s182 = sphi 0, %s181
      %s198 = sphi 0, %s182
    $region4: #{tpu_custom_call.1} parent=1 // loop_header_branch
      %19 = sbr.rel (%p17) target = $region8
    $region5: #{tpu_custom_call.1} parent=1 // loop_body
      %s21 = ssub.s32 %s16, 1
      %s22 = ssub.s32 %s16, 2
      %s23 = sadd.s32 %s16, 1
      %s24 = ssub.s32 %s16, %s23
      %p25 = scmp.eq.s32.totalorder %s24, 0
      %s27 = sadd.s32 %s26, 1
      %s28 = scalar_select %p25, %s26, %s27
      %p31 = pneg %p25
      %p32 = scmp.eq.s32.totalorder %s16, 1
      %p33 = por %p31, %p32
      %p34 = scmp.ne.s32.totalorder %s26, %s29
      %p35 = scmp.eq.s32.totalorder %s16, 0
      %p36 = por %p34, %p35
      %p37 = scmp.ne.s32.totalorder %s26, %s29
      %p38 = scmp.eq.s32.totalorder %s21, 1
      %p39 = por %p37, %p38
      %p40 = scmp.ne.s32.totalorder %s29, %s30
      %p41 = scmp.eq.s32.totalorder %s21, 0
      %p42 = por %p40, %p41
      %p43 = scmp.ne.s32.totalorder %s29, %s30
      %p44 = scmp.eq.s32.totalorder %s22, 1
      %p45 = por %p43, %p44
      %p47 = scmp.ne.s32.totalorder %s30, %s46
      %p48 = scmp.eq.s32.totalorder %s22, 0
      %p49 = por %p47, %p48
      %s51 = sadd.s32 %s50, 1
      %p54 = scmp.eq.s32.totalorder %s16, 1
      %p55 = scmp.ne.s32.totalorder %s50, %s52
      %p56 = scmp.eq.s32.totalorder %s16, 0
      %p57 = por %p55, %p56
      %p58 = scmp.ne.s32.totalorder %s50, %s52
      %p59 = scmp.eq.s32.totalorder %s21, 1
      %p60 = por %p58, %p59
      %p61 = scmp.ne.s32.totalorder %s52, %s53
      %p62 = scmp.eq.s32.totalorder %s21, 0
      %p63 = por %p61, %p62
      %p64 = scmp.ne.s32.totalorder %s52, %s53
      %p65 = scmp.eq.s32.totalorder %s22, 1
      %p66 = por %p64, %p65
      %p68 = scmp.ne.s32.totalorder %s53, %s67
      %p69 = scmp.eq.s32.totalorder %s22, 0
      %p70 = por %p68, %p69
      %s72 = sadd.s32 %s71, 1
      %p75 = scmp.eq.s32.totalorder %s16, 1
      %p76 = scmp.ne.s32.totalorder %s71, %s73
      %p77 = scmp.eq.s32.totalorder %s16, 0
      %p78 = por %p76, %p77
      %p79 = scmp.ne.s32.totalorder %s71, %s73
      %p80 = scmp.eq.s32.totalorder %s21, 1
      %p81 = por %p79, %p80
      %p82 = scmp.ne.s32.totalorder %s73, %s74
      %p83 = scmp.eq.s32.totalorder %s21, 0
      %p84 = por %p82, %p83
      %p85 = scmp.ne.s32.totalorder %s73, %s74
      %p86 = scmp.eq.s32.totalorder %s22, 1
      %p87 = por %p85, %p86
      %p89 = scmp.ne.s32.totalorder %s74, %s88
      %p90 = scmp.eq.s32.totalorder %s22, 0
      %p91 = por %p89, %p90
      %s93 = sadd.s32 %s92, 1
      %p96 = scmp.eq.s32.totalorder %s16, 1
      %p97 = scmp.ne.s32.totalorder %s92, %s94
      %p98 = scmp.eq.s32.totalorder %s16, 0
      %p99 = por %p97, %p98
      %p100 = scmp.ne.s32.totalorder %s92, %s94
      %p101 = scmp.eq.s32.totalorder %s21, 1
      %p102 = por %p100, %p101
      %p103 = scmp.ne.s32.totalorder %s94, %s95
      %p104 = scmp.eq.s32.totalorder %s21, 0
      %p105 = por %p103, %p104
      %p106 = scmp.ne.s32.totalorder %s94, %s95
      %p107 = scmp.eq.s32.totalorder %s22, 1
      %p108 = por %p106, %p107
      %p110 = scmp.ne.s32.totalorder %s95, %s109
      %p111 = scmp.eq.s32.totalorder %s22, 0
      %p112 = por %p110, %p111
      %s114 = sadd.s32 %s113, 1
      %p117 = scmp.eq.s32.totalorder %s16, 1
      %p118 = scmp.ne.s32.totalorder %s113, %s115
      %p119 = scmp.eq.s32.totalorder %s16, 0
      %p120 = por %p118, %p119
      %p121 = scmp.ne.s32.totalorder %s113, %s115
      %p122 = scmp.eq.s32.totalorder %s21, 1
      %p123 = por %p121, %p122
      %p124 = scmp.ne.s32.totalorder %s115, %s116
      %p125 = scmp.eq.s32.totalorder %s21, 0
      %p126 = por %p124, %p125
      %p127 = scmp.ne.s32.totalorder %s115, %s116
      %p128 = scmp.eq.s32.totalorder %s22, 1
      %p129 = por %p127, %p128
      %p131 = scmp.ne.s32.totalorder %s116, %s130
      %p132 = scmp.eq.s32.totalorder %s22, 0
      %p133 = por %p131, %p132
      %s135 = sadd.s32 %s134, 1
      %p138 = scmp.eq.s32.totalorder %s16, 1
      %p139 = scmp.ne.s32.totalorder %s134, %s136
      %p140 = scmp.eq.s32.totalorder %s16, 0
      %p141 = por %p139, %p140
      %p142 = scmp.ne.s32.totalorder %s134, %s136
      %p143 = scmp.eq.s32.totalorder %s21, 1
      %p144 = por %p142, %p143
      %p145 = scmp.ne.s32.totalorder %s136, %s137
      %p146 = scmp.eq.s32.totalorder %s21, 0
      %p147 = por %p145, %p146
      %p148 = scmp.ne.s32.totalorder %s136, %s137
      %p149 = scmp.eq.s32.totalorder %s22, 1
      %p150 = por %p148, %p149
      %p152 = scmp.ne.s32.totalorder %s137, %s151
      %p153 = scmp.eq.s32.totalorder %s22, 0
      %p154 = por %p152, %p153
      %s156 = sadd.s32 %s155, 1
      %p159 = scmp.eq.s32.totalorder %s16, 1
      %p160 = scmp.ne.s32.totalorder %s155, %s157
      %p161 = scmp.eq.s32.totalorder %s16, 0
      %p162 = por %p160, %p161
      %p163 = scmp.ne.s32.totalorder %s155, %s157
      %p164 = scmp.eq.s32.totalorder %s21, 1
      %p165 = por %p163, %p164
      %p166 = scmp.ne.s32.totalorder %s157, %s158
      %p167 = scmp.eq.s32.totalorder %s21, 0
      %p168 = por %p166, %p167
      %p169 = scmp.ne.s32.totalorder %s157, %s158
      %p170 = scmp.eq.s32.totalorder %s22, 1
      %p171 = por %p169, %p170
      %p173 = scmp.ne.s32.totalorder %s158, %s172
      %p174 = scmp.eq.s32.totalorder %s22, 0
      %p175 = por %p173, %p174
      %s176 = ssub.s32 %s16, %s23
      %p177 = scmp.eq.s32.totalorder %s176, 0
      %s179 = sadd.s32 %s178, 1
      %s180 = scalar_select %p177, %s178, %s179
      %p183 = pneg %p177
      %p184 = scmp.eq.s32.totalorder %s16, 1
      %p185 = por %p183, %p184
      %p186 = scmp.ne.s32.totalorder %s178, %s181
      %p187 = scmp.eq.s32.totalorder %s16, 0
      %p188 = por %p186, %p187
      %p189 = scmp.ne.s32.totalorder %s178, %s181
      %p190 = scmp.eq.s32.totalorder %s21, 1
      %p191 = por %p189, %p190
      %p192 = scmp.ne.s32.totalorder %s181, %s182
      %p193 = scmp.eq.s32.totalorder %s21, 0
      %p194 = por %p192, %p193
      %p195 = scmp.ne.s32.totalorder %s181, %s182
      %p196 = scmp.eq.s32.totalorder %s22, 1
      %p197 = por %p195, %p196
      %p199 = scmp.ne.s32.totalorder %s182, %s198
      %p200 = scmp.eq.s32.totalorder %s22, 0
      %p201 = por %p199, %p200
      %p202 = scmp.le.s32.totalorder 1, %s16
      %p203 = scmp.lt.s32.totalorder %s16, 3
      %p204 = pnand %p202, %p203
      %p205 = pneg %p204
      // Predicated region
      $region9: #{tpu_custom_call.1} parent=5 // pred_check
        _
      $region10: #{tpu_custom_call.1} parent=5 // pred_check_branch
        %207 = sbr.rel (%p204) target = $region12
      $region11: #{tpu_custom_call.1} parent=5 // pred_region
        %s208 = ssub.s32 %s16, 1
        // Predicated region
        $region13: #{tpu_custom_call.1} parent=11 // pred_check
          %p209 = pneg %p63
        $region14: #{tpu_custom_call.1} parent=11 // pred_check_branch
          %211 = sbr.rel (%p209) target = $region16
        $region15: #{tpu_custom_call.1} parent=11 // pred_region
          _
        $region16: #{tpu_custom_call.1} parent=11 // pred_fallthru
          _
        // Predicated region
        $region17: #{tpu_custom_call.1} parent=11 // pred_check
          %p212 = pneg %p84
        $region18: #{tpu_custom_call.1} parent=11 // pred_check_branch
          %214 = sbr.rel (%p212) target = $region20
        $region19: #{tpu_custom_call.1} parent=11 // pred_region
          _
        $region20: #{tpu_custom_call.1} parent=11 // pred_fallthru
          _
        // Predicated region
        $region21: #{tpu_custom_call.1} parent=11 // pred_check
          %p215 = pneg %p105
        $region22: #{tpu_custom_call.1} parent=11 // pred_check_branch
          %217 = sbr.rel (%p215) target = $region24
        $region23: #{tpu_custom_call.1} parent=11 // pred_region
          _
        $region24: #{tpu_custom_call.1} parent=11 // pred_fallthru
          _
        // Predicated region
        $region25: #{tpu_custom_call.1} parent=11 // pred_check
          %p218 = pneg %p126
        $region26: #{tpu_custom_call.1} parent=11 // pred_check_branch
          %220 = sbr.rel (%p218) target = $region28
        $region27: #{tpu_custom_call.1} parent=11 // pred_region
          _
        $region28: #{tpu_custom_call.1} parent=11 // pred_fallthru
          _
        // Predicated region
        $region29: #{tpu_custom_call.1} parent=11 // pred_check
          %p221 = pneg %p147
        $region30: #{tpu_custom_call.1} parent=11 // pred_check_branch
          %223 = sbr.rel (%p221) target = $region32
        $region31: #{tpu_custom_call.1} parent=11 // pred_region
          _
        $region32: #{tpu_custom_call.1} parent=11 // pred_fallthru
          _
        // Predicated region
        $region33: #{tpu_custom_call.1} parent=11 // pred_check
          %p224 = pneg %p168
        $region34: #{tpu_custom_call.1} parent=11 // pred_check_branch
          %226 = sbr.rel (%p224) target = $region36
        $region35: #{tpu_custom_call.1} parent=11 // pred_region
          _
        $region36: #{tpu_custom_call.1} parent=11 // pred_fallthru
          _
      $region12: #{tpu_custom_call.1} parent=5 // pred_fallthru
        _
      %p227 = scmp.lt.s32.totalorder %s16, 2
      // Predicated region
      $region37: #{tpu_custom_call.1} parent=5 // pred_check
        %p228 = pneg %p227
      $region38: #{tpu_custom_call.1} parent=5 // pred_check_branch
        %230 = sbr.rel (%p228) target = $region40
      $region39: #{tpu_custom_call.1} parent=5 // pred_region
        // Predicated region
        $region41: #{tpu_custom_call.1} parent=39 // pred_check
          %p231 = pneg %p36
        $region42: #{tpu_custom_call.1} parent=39 // pred_check_branch
          %233 = sbr.rel (%p231) target = $region44
        $region43: #{tpu_custom_call.1} parent=39 // pred_region
          %s234 = smul.u32 2, %s16
          %p235 = scmp.lt.s32.totalorder %s234, 3
          %s236 = scalar_select %p235, %s234, 3
          %s237 = smul.addr %s236, 2
          %s238 = smul.addr %s237, 4
          %s239 = scalar_lea.vmem %s0, %s238
          %s240 = smul.u32 2, %s16
        $region44: #{tpu_custom_call.1} parent=39 // pred_fallthru
          _
      $region40: #{tpu_custom_call.1} parent=5 // pred_fallthru
        _
      %p241 = scmp.le.s32.totalorder 1, %s16
      %p242 = scmp.lt.s32.totalorder %s16, 3
      %p243 = pnand %p241, %p242
      %p244 = pneg %p243
      // Predicated region
      $region45: #{tpu_custom_call.1} parent=5 // pred_check
        _
      $region46: #{tpu_custom_call.1} parent=5 // pred_check_branch
        %246 = sbr.rel (%p243) target = $region48
      $region47: #{tpu_custom_call.1} parent=5 // pred_region
        %s247 = ssub.s32 %s16, 1
        %s248 = smul.u32 2, %s21
        %p249 = scmp.lt.s32.totalorder %s248, 3
        %s250 = scalar_select %p249, %s248, 3
        %s251 = smul.addr %s250, 2
        %s252 = smul.addr %s251, 4
        %s253 = scalar_lea.vmem %s0, %s252
        %p254 = pneg %p42
        %p255 = pneg %p39
        %p256 = pneg %p63
        %p257 = pneg %p60
        %p258 = pneg %p84
        %p259 = pneg %p81
        %p260 = pneg %p105
        %p261 = pneg %p102
        %p262 = pneg %p126
        %p263 = pneg %p123
        %p264 = pneg %p147
        %p265 = pneg %p144
        %p266 = pneg %p168
        %p267 = pneg %p165
        %p268 = pneg %p194
        %p269 = pneg %p191
        %s270 = sand.u32 %s181, 1
        %s271 = scalar_lea.sflag [#allocation3], %s270
        %s272 = sand.u32 %s181, 1
        %s273 = smul.addr %s272, 2
        %s274 = scalar_lea.vmem [#allocation2], %s273
        %s275 = smul.u32 2, %s21
        %p276 = scmp.lt.s32.totalorder %s275, 3
        %s277 = scalar_select %p276, %s275, 3
        %s278 = smul.addr %s277, 2
        %s279 = smul.addr %s278, 4
        %s280 = scalar_lea.vmem %s0, %s279
        %s281 = smul.u32 2, %s21
        %v283 = vld [vmem:[%s280] sm:$0xf]
        %v284 = vld [vmem:[%s280 + $0x4] sm:$0xf]
        %v285 = vld [vmem:[%s280 + $0x8] sm:$0xf]
        %v286 = vld [vmem:[%s280 + $0xc] sm:$0xf]
        %v291 = vunpack.c.l.b16 %v283
        %v292 = vunpack.c.l.b16 %v284
        %v293 = vunpack.c.l.b16 %v285
        %v294 = vunpack.c.l.b16 %v286
        %v295 = vpack.c.b16 %v292, %v291
        %v296 = vpack.c.b16 %v294, %v293
        %v298 = vshrl.u32 %v295, 16
        %v300 = vrot.slane %v298, 7
        %v301 = vshll.u32 %v295, 16
        %v303 = vor.u32 %v300, %v301
        %v305 = vshrl.u32 %v296, 16
        %v307 = vrot.slane %v305, 7
        %v308 = vshll.u32 %v296, 16
        %v310 = vor.u32 %v307, %v308
        %vm315 = vcmask 1040384
        %vm316 = vsmask.f32 256
        %vm317 = vmand %vm315, %vm316
        %v318 = vsel %vm317, 0, %v303
        %v319 = vsel %vm317, 0, %v310
        %v320 = vsel %vm317, %v300, 0
        %v321 = vsel %vm317, %v307, 0
        %vm322 = vsmask.f32 7424
        %v324 = vshrl.u32 %v318, 16
        %v326 = vshll.u32 %v318, 16
        %v328 = vrot.slane %v326, 1
        %v329 = vor.u32 %v324, %v328
        %v331 = vshll.u32 %v320, 16
        %v333 = vrot.slane %v331, 1
        %v334 = vsel %vm322, %v329, %v333
        %v336 = vshrl.u32 %v319, 16
        %v338 = vshll.u32 %v319, 16
        %v340 = vrot.slane %v338, 1
        %v341 = vor.u32 %v336, %v340
        %v343 = vshll.u32 %v321, 16
        %v345 = vrot.slane %v343, 1
        %v346 = vsel %vm322, %v341, %v345
        %347 = vrot.lane.b32.xlu0 %v334, 4
        %v348 = vpop.permute.xlu0 %347
        %349 = vrot.lane.b32.xlu0 %v346, 4
        %v350 = vpop.permute.xlu0 %349
        %vm355 = vcmask 1046528
        %v356 = vrot.slane %v318, 1
        %v357 = vrot.slane %v320, 1
        %v358 = vsel %vm355, %v356, %v357
        %v359 = vrot.slane %v319, 1
        %v360 = vrot.slane %v321, 1
        %v361 = vsel %vm355, %v359, %v360
        %362 = vrot.lane.b32.xlu0 %v358, 8
        %v363 = vpop.permute.xlu0 %362
        %364 = vrot.lane.b32.xlu0 %v361, 8
        %v365 = vpop.permute.xlu0 %364
        %vm366 = vcmask 31744
        %v368 = vsel %vm366, %v318, %v348
        %v370 = vsel %vm366, %v319, %v350
        %vm371 = vcmask 64512
        %v373 = vsel %vm371, %v368, %v363
        %v375 = vsel %vm371, %v370, %v365
        %v376 = vld [vmem:[%s1] sm:$0xf]
        %v377 = vld [vmem:[%s1 + $0x4] sm:$0x3]
        %v378 = vld [vmem:[%s2] sm:$0x1]
        %v380 = vlaneseq
        %v381 = vshrl.u32 %v380, 7
        %v382 = vsub.s32 0, %v381
        %v383 = vrot.slane %v378, %v382
        %v387 = vunpack.c.l.b16 %v376
        %v388 = vunpack.c.l.b16 %v377
        %v389 = vpack.c.b16 %v388, %v387
        %vm390 = vcmask 97280
        %v391 = vsel %vm390, %v373, 0
        %v393 = vsel %vm390, %v375, 0
        %vm395 = vcmask 1045504
        %v397 = vsel %vm395, %v389, 0
        %399 = vmatprep.subr.bf16.mxu0 0
        %400 = vmatpush1.bf16.msra.mxu0 %v397
        %401 = vmatprep.subr.bf16.mxu0 0
        %402 = vmatpush1.bf16.msra.mxu0 0
        %403 = vmatprep.subr.bf16.mxu0 0
        %404 = vmatpush1.bf16.msra.mxu0 0
        %405 = vmatprep.subr.bf16.mxu0 0
        %406 = vmatpush1.bf16.msra.mxu0 0
        %407 = vmatprep.subr.bf16.mxu0 0
        %408 = vmatpush1.bf16.msra.mxu0 0
        %409 = vmatprep.subr.bf16.mxu0 0
        %410 = vmatpush1.bf16.msra.mxu0 0
        %411 = vmatprep.subr.bf16.mxu0 0
        %412 = vmatpush1.bf16.msra.mxu0 0
        %413 = vmatprep.subr.bf16.mxu0 0
        %414 = vmatpush1.bf16.msra.mxu0 0
        %415 = vmatprep.subr.bf16.mxu0 0
        %416 = vmatpush1.bf16.msra.mxu0 0
        %417 = vmatprep.subr.bf16.mxu0 0
        %418 = vmatpush1.bf16.msra.mxu0 0
        %419 = vmatprep.subr.bf16.mxu0 0
        %420 = vmatpush1.bf16.msra.mxu0 0
        %421 = vmatprep.subr.bf16.mxu0 0
        %422 = vmatpush1.bf16.msra.mxu0 0
        %423 = vmatprep.subr.bf16.mxu0 0
        %424 = vmatpush1.bf16.msra.mxu0 0
        %425 = vmatprep.subr.bf16.mxu0 0
        %426 = vmatpush1.bf16.msra.mxu0 0
        %427 = vmatprep.subr.bf16.mxu0 0
        %428 = vmatpush1.bf16.msra.mxu0 0
        %429 = vmatprep.subr.bf16.mxu0 0
        %430 = vmatpush1.bf16.msra.mxu0 0
        %431 = vmatprep.mubr.bf16.mxu0 0
        %432 = vmatmul.mubr.bf16.gmra.mrb[0].mxu0 %v391
        %v433 = vpop.f32.mrb[0].mxu0
        %v434 = vadd.f32 %v383, %v433
        %v435 = vpop.f32.mrb[0].mxu0
        %v436 = vpop.f32.mrb[0].mxu0
        %v437 = vadd.f32 %v383, %v436
        %v438 = vpop.f32.mrb[0].mxu0
        %439 = vmatprep.mubr.bf16.mxu0 0
        %440 = vmatmul.mubr.bf16.gmra.mrb[0].mxu0 %v393
        %v441 = vpop.f32.mrb[0].mxu0
        %v442 = vadd.f32 %v383, %v441
        %v443 = vpop.f32.mrb[0].mxu0
        %v444 = vpop.f32.mrb[0].mxu0
        %v445 = vadd.f32 %v383, %v444
        %v446 = vpop.f32.mrb[0].mxu0
        %447 = vdwg.mxu0
        %v448 = vmax.f32 %v434, 0.0
        %v449 = vmax.f32 %v437, 0.0
        %v450 = vmax.f32 %v442, 0.0
        %v451 = vmax.f32 %v445, 0.0
        %v452 = vpack.c.bf16 %v449, %v448
        %v453 = vpack.c.bf16 %v451, %v450
        %v456 = vrot.slane %v452, 7
        %v457 = vrot.slane %v453, 7
        %vm458 = vcmask 1040384
        %v461 = vsel %vm458, 0, %v456
        %v463 = vsel %vm458, 0, %v457
        %v464 = vsel %vm458, %v456, 0
        %v465 = vsel %vm458, %v457, 0
        %v466 = vshrl.u32 %v461, 16
        %v468 = vshll.u32 %v461, 16
        %v470 = vrot.slane %v468, 1
        %v471 = vor.u32 %v466, %v470
        %v472 = vshll.u32 %v464, 16
        %v474 = vrot.slane %v472, 1
        %v475 = vsel %vm322, %v471, %v474
        %v476 = vshrl.u32 %v463, 16
        %v478 = vshll.u32 %v463, 16
        %v480 = vrot.slane %v478, 1
        %v481 = vor.u32 %v476, %v480
        %v482 = vshll.u32 %v465, 16
        %v484 = vrot.slane %v482, 1
        %v485 = vsel %vm322, %v481, %v484
        %486 = vrot.lane.b32.xlu0 %v475, 8
        %v487 = vpop.permute.xlu0 %486
        %488 = vrot.lane.b32.xlu0 %v485, 8
        %v489 = vpop.permute.xlu0 %488
        %v494 = vrot.slane %v461, 1
        %v495 = vrot.slane %v464, 1
        %v496 = vsel %vm355, %v494, %v495
        %v497 = vrot.slane %v463, 1
        %v498 = vrot.slane %v465, 1
        %v499 = vsel %vm355, %v497, %v498
        %500 = vrot.lane.b32.xlu0 %v496, 16
        %v501 = vpop.permute.xlu0 %500
        %502 = vrot.lane.b32.xlu0 %v499, 16
        %v503 = vpop.permute.xlu0 %502
        %vm504 = vsmask.f32 6400
        %v505 = vrot.slane %v466, 1
        %v506 = vrot.slane %v468, 2
        %v507 = vor.u32 %v505, %v506
        %v508 = vshrl.u32 %v464, 16
        %v510 = vrot.slane %v508, 1
        %v511 = vrot.slane %v472, 2
        %v512 = vor.u32 %v510, %v511
        %v513 = vsel %vm504, %v507, %v512
        %v514 = vrot.slane %v476, 1
        %v515 = vrot.slane %v478, 2
        %v516 = vor.u32 %v514, %v515
        %v517 = vshrl.u32 %v465, 16
        %v519 = vrot.slane %v517, 1
        %v520 = vrot.slane %v482, 2
        %v521 = vor.u32 %v519, %v520
        %v522 = vsel %vm504, %v516, %v521
        %523 = vrot.lane.b32.xlu0 %v513, 24
        %v524 = vpop.permute.xlu0 %523
        %525 = vrot.lane.b32.xlu0 %v522, 24
        %v526 = vpop.permute.xlu0 %525
        %vm527 = vcmask 1045504
        %v528 = vrot.slane %v461, 2
        %v529 = vrot.slane %v464, 2
        %v530 = vsel %vm527, %v528, %v529
        %v531 = vrot.slane %v463, 2
        %v532 = vrot.slane %v465, 2
        %v533 = vsel %vm527, %v531, %v532
        %534 = vrot.lane.b32.xlu0 %v530, 32
        %v535 = vpop.permute.xlu0 %534
        %536 = vrot.lane.b32.xlu0 %v533, 32
        %v537 = vpop.permute.xlu0 %536
        %v539 = vsel %vm371, %v461, %v487
        %v541 = vsel %vm371, %v463, %v489
        %vm542 = vcmask 130048
        %v544 = vsel %vm542, %v539, %v501
        %v546 = vsel %vm542, %v541, %v503
        %vm547 = vcmask 195584
        %v549 = vsel %vm547, %v544, %v524
        %v551 = vsel %vm547, %v546, %v526
        %vm552 = vcmask 261120
        %v554 = vsel %vm552, %v549, %v535
        %v556 = vsel %vm552, %v551, %v537
        %v557 = vld [vmem:[%s3] sm:$0xf]
        %v558 = vld [vmem:[%s3 + $0x4] sm:$0xf]
        %v559 = vld [vmem:[%s3 + $0x8] sm:$0xf]
        %v560 = vld [vmem:[%s3 + $0xc] sm:$0xf]
        %v561 = vld [vmem:[%s3 + $0x10] sm:$0xf]
        %v562 = vld [vmem:[%s4] sm:$0x1]
        %v564 = vlaneseq
        %v565 = vshrl.u32 %v564, 7
        %v566 = vsub.s32 0, %v565
        %v567 = vrot.slane %v562, %v566
        %v574 = vunpack.c.l.b16 %v557
        %v575 = vunpack.c.l.b16 %v558
        %v576 = vunpack.c.l.b16 %v559
        %v577 = vunpack.c.l.b16 %v560
        %v578 = vunpack.c.l.b16 %v561
        %v579 = vpack.c.b16 %v575, %v574
        %v580 = vpack.c.b16 %v577, %v576
        %v581 = vpack.c.b16 %v578, %v578
        %vm584 = vcmask 326656
        %v585 = vsel %vm584, %v554, 0
        %v587 = vsel %vm584, %v556, 0
        %vm589 = vcmask 1043456
        %v591 = vsel %vm589, %v581, 0
        %593 = vmatprep.subr.bf16.mxu0 0
        %594 = vmatpush1.bf16.msra.mxu0 %v579
        %595 = vmatprep.subr.bf16.mxu0 0
        %596 = vmatpush1.bf16.msra.mxu0 %v580
        %597 = vmatprep.subr.bf16.mxu0 0
        %598 = vmatpush1.bf16.msra.mxu0 %v591
        %599 = vmatprep.subr.bf16.mxu0 0
        %600 = vmatpush1.bf16.msra.mxu0 0
        %601 = vmatprep.subr.bf16.mxu0 0
        %602 = vmatpush1.bf16.msra.mxu0 0
        %603 = vmatprep.subr.bf16.mxu0 0
        %604 = vmatpush1.bf16.msra.mxu0 0
        %605 = vmatprep.subr.bf16.mxu0 0
        %606 = vmatpush1.bf16.msra.mxu0 0
        %607 = vmatprep.subr.bf16.mxu0 0
        %608 = vmatpush1.bf16.msra.mxu0 0
        %609 = vmatprep.subr.bf16.mxu0 0
        %610 = vmatpush1.bf16.msra.mxu0 0
        %611 = vmatprep.subr.bf16.mxu0 0
        %612 = vmatpush1.bf16.msra.mxu0 0
        %613 = vmatprep.subr.bf16.mxu0 0
        %614 = vmatpush1.bf16.msra.mxu0 0
        %615 = vmatprep.subr.bf16.mxu0 0
        %616 = vmatpush1.bf16.msra.mxu0 0
        %617 = vmatprep.subr.bf16.mxu0 0
        %618 = vmatpush1.bf16.msra.mxu0 0
        %619 = vmatprep.subr.bf16.mxu0 0
        %620 = vmatpush1.bf16.msra.mxu0 0
        %621 = vmatprep.subr.bf16.mxu0 0
        %622 = vmatpush1.bf16.msra.mxu0 0
        %623 = vmatprep.subr.bf16.mxu0 0
        %624 = vmatpush1.bf16.msra.mxu0 0
        %625 = vmatprep.mubr.bf16.mxu0 0
        %626 = vmatmul.mubr.bf16.gmra.mrb[0].mxu0 %v585
        %v627 = vpop.f32.mrb[0].mxu0
        %v628 = vadd.f32 %v567, %v627
        %v629 = vpop.f32.mrb[0].mxu0
        %v630 = vpop.f32.mrb[0].mxu0
        %v631 = vadd.f32 %v567, %v630
        %v632 = vpop.f32.mrb[0].mxu0
        %633 = vmatprep.mubr.bf16.mxu0 0
        %634 = vmatmul.mubr.bf16.gmra.mrb[0].mxu0 %v587
        %v635 = vpop.f32.mrb[0].mxu0
        %v636 = vadd.f32 %v567, %v635
        %v637 = vpop.f32.mrb[0].mxu0
        %v638 = vpop.f32.mrb[0].mxu0
        %v639 = vadd.f32 %v567, %v638
        %v640 = vpop.f32.mrb[0].mxu0
        %641 = vdwg.mxu0
        %v642 = vmax.f32 %v628, 0.0
        %v643 = vmax.f32 %v631, 0.0
        %v644 = vmax.f32 %v636, 0.0
        %v645 = vmax.f32 %v639, 0.0
        %v646 = vsel %vm542, %v642, 0.0
        %v647 = vsel %vm542, %v643, 0.0
        %v648 = vadd.f32 %v646, %v647
        %v649 = vrot.slane %v648, 4
        %v650 = vadd.f32 %v648, %v649
        %v651 = vrot.slane %v650, 2
        %v652 = vadd.f32 %v650, %v651
        %v653 = vrot.slane %v652, 1
        %v654 = vadd.f32 %v652, %v653
        %v655 = vsel %vm542, %v644, 0.0
        %v656 = vsel %vm542, %v645, 0.0
        %v657 = vadd.f32 %v655, %v656
        %v658 = vrot.slane %v657, 4
        %v659 = vadd.f32 %v657, %v658
        %v660 = vrot.slane %v659, 2
        %v661 = vadd.f32 %v659, %v660
        %v662 = vrot.slane %v661, 1
        %v663 = vadd.f32 %v661, %v662
        %v664 = vmul.f32 %v654, 0.0625
        %v665 = vmul.f32 %v663, 0.0625
        %v666 = vpack.c.bf16 %v664, %v664
        %v667 = vpack.c.bf16 %v665, %v665
        %v668 = vld [vmem:[%s5] sm:$0xf]
        %v669 = vld [vmem:[%s5 + $0x4] sm:$0xf]
        %v670 = vld [vmem:[%s6] sm:$0x1]
        %v672 = vlaneseq
        %v673 = vshrl.u32 %v672, 7
        %v674 = vsub.s32 0, %v673
        %v675 = vrot.slane %v670, %v674
        %v679 = vunpack.c.l.b16 %v666
        %v680 = vunpack.c.l.b16 %v667
        %vm681 = vcmask 1041409
        %v682 = vsel %vm681, %v680, %v679
        %v683 = vpack.c.b16 %v682, %v682
        %v686 = vunpack.c.l.b16 %v668
        %v687 = vunpack.c.l.b16 %v669
        %v688 = vpack.c.b16 %v687, %v686
        %v691 = vsel %vm542, %v683, 0
        %693 = vmatprep.subr.bf16.mxu0 0
        %694 = vmatpush1.bf16.msra.mxu0 %v688
        %695 = vmatprep.subr.bf16.mxu0 0
        %696 = vmatpush1.bf16.msra.mxu0 0
        %697 = vmatprep.subr.bf16.mxu0 0
        %698 = vmatpush1.bf16.msra.mxu0 0
        %699 = vmatprep.subr.bf16.mxu0 0
        %700 = vmatpush1.bf16.msra.mxu0 0
        %701 = vmatprep.subr.bf16.mxu0 0
        %702 = vmatpush1.bf16.msra.mxu0 0
        %703 = vmatprep.subr.bf16.mxu0 0
        %704 = vmatpush1.bf16.msra.mxu0 0
        %705 = vmatprep.subr.bf16.mxu0 0
        %706 = vmatpush1.bf16.msra.mxu0 0
        %707 = vmatprep.subr.bf16.mxu0 0
        %708 = vmatpush1.bf16.msra.mxu0 0
        %709 = vmatprep.subr.bf16.mxu0 0
        %710 = vmatpush1.bf16.msra.mxu0 0
        %711 = vmatprep.subr.bf16.mxu0 0
        %712 = vmatpush1.bf16.msra.mxu0 0
        %713 = vmatprep.subr.bf16.mxu0 0
        %714 = vmatpush1.bf16.msra.mxu0 0
        %715 = vmatprep.subr.bf16.mxu0 0
        %716 = vmatpush1.bf16.msra.mxu0 0
        %717 = vmatprep.subr.bf16.mxu0 0
        %718 = vmatpush1.bf16.msra.mxu0 0
        %719 = vmatprep.subr.bf16.mxu0 0
        %720 = vmatpush1.bf16.msra.mxu0 0
        %721 = vmatprep.subr.bf16.mxu0 0
        %722 = vmatpush1.bf16.msra.mxu0 0
        %723 = vmatprep.subr.bf16.mxu0 0
        %724 = vmatpush1.bf16.msra.mxu0 0
        %725 = vmatprep.mubr.bf16.mxu0 0
        %726 = vmatmul.mubr.bf16.gmra.mrb[0].mxu0 %v691
        %v727 = vpop.f32.mrb[0].mxu0
        %v728 = vadd.f32 %v675, %v727
        %v729 = vpop.f32.mrb[0].mxu0
        %v730 = vpop.f32.mrb[0].mxu0
        %v731 = vpop.f32.mrb[0].mxu0
        %732 = vdwg.mxu0
        %733 = vst [vmem:[%s274] sm:$0x3] %v728
        %s734 = sand.u32 %s181, 1
        %s735 = scalar_lea.sflag [#allocation3], %s734
        %s736 = sand.u32 %s181, 1
        %s737 = smul.addr %s736, 2
        %s738 = scalar_lea.vmem [#allocation2], %s737
        // Predicated region
        $region49: #{tpu_custom_call.1} parent=47 // pred_check
          %p739 = pneg %p191
        $region50: #{tpu_custom_call.1} parent=47 // pred_check_branch
          %741 = sbr.rel (%p739) target = $region52
        $region51: #{tpu_custom_call.1} parent=47 // pred_region
          %s743 = ssub.s32 32, 32
          %744 = vsyncadd %s735, %s743
          %s745 = smul.addr %s21, 32
          %s746 = scalar_lea.hbm %s7, %s745
          %s748 = sshll.u32 %s738, 4
          %s749 = int_to_ptr.vmem [resolvable:$true] %s748
          %751 = dma.vmem_to_hbm [thread:$0]  %s749, 32, %s746, %s735
        $region52: #{tpu_custom_call.1} parent=47 // pred_fallthru
          _
      $region48: #{tpu_custom_call.1} parent=5 // pred_fallthru
        _
      %p752 = scmp.le.s32.totalorder 2, %s16
      // Predicated region
      $region53: #{tpu_custom_call.1} parent=5 // pred_check
        %p753 = pneg %p752
      $region54: #{tpu_custom_call.1} parent=5 // pred_check_branch
        %755 = sbr.rel (%p753) target = $region56
      $region55: #{tpu_custom_call.1} parent=5 // pred_region
        %s756 = ssub.s32 %s16, 2
        // Predicated region
        $region57: #{tpu_custom_call.1} parent=55 // pred_check
          %p757 = pneg %p197
        $region58: #{tpu_custom_call.1} parent=55 // pred_check_branch
          %759 = sbr.rel (%p757) target = $region60
        $region59: #{tpu_custom_call.1} parent=55 // pred_region
          %s760 = sand.u32 %s182, 1
          %s761 = scalar_lea.sflag [#allocation3], %s760
          %s762 = sand.u32 %s182, 1
          %s763 = smul.addr %s762, 2
          %s764 = scalar_lea.vmem [#allocation2], %s763
          %765 = dma.done %s761, 32
        $region60: #{tpu_custom_call.1} parent=55 // pred_fallthru
          _
      $region56: #{tpu_custom_call.1} parent=5 // pred_fallthru
        _
    $region6: #{tpu_custom_call.1} parent=1 // loop_footer
      %s20 = sadd.s32 1, %s16
    $region7: #{tpu_custom_call.1} parent=1 // loop_footer_branch
      %15 = sbr.rel target = $region3
    $region8: #{tpu_custom_call.1} parent=1 // loop_exit
      _
    %766 = vsyncpa [#allocation3], 1
    %s767 = scalar_lea.sflag [#allocation3], 1
    %768 = vsyncpa %s767, 1

// kernel: tpu_custom_call.1
$region0: #{tpu_custom_call.1}
  #allocation0 [shape = 'u32[]', space=smem, size = 0x4, offset = 0x4, fixed_abs, tag = 'smem constant byte address 0x4 - core index']
  #allocation1 [shape = 'u32[144,128]{1,0:T(1,128)}', space=vmem, size = 0x12000, scoped, tag = 'internal scratch']
  %s0 = inlined_call_operand.vmem [shape: bf16[4,16,4], index: 0, kind: input, shape index: {}]
  %s1 = inlined_call_operand.vmem [shape: bf16[12,8], index: 1, kind: input, shape index: {}]
  %s2 = inlined_call_operand.vmem [shape: f32[1,8], index: 2, kind: input, shape index: {}]
  %s3 = inlined_call_operand.vmem [shape: bf16[40,16], index: 3, kind: input, shape index: {}]
  %s4 = inlined_call_operand.vmem [shape: f32[1,16], index: 4, kind: input, shape index: {}]
  %s5 = inlined_call_operand.vmem [shape: bf16[16,128], index: 5, kind: input, shape index: {}]
  %s6 = inlined_call_operand.vmem [shape: f32[1,128], index: 6, kind: input, shape index: {}]
  %s7 = inlined_call_operand.hbm [shape: f32[2,2,128], index: 7, kind: output, shape index: {}]
  %s8 = sld [smem:[#allocation0]]
  $region61: #{tpu_custom_call.1} parent=0
    _
  %s10 = ssub.s32 1, %s8
  %s11 = scalar_select 0, %s10, %s8
  $region1: #{tpu_custom_call.1} parent=0
    #allocation2 [shape = 'u8[2048]{0}', space=vmem, size = 0x800, scoped, tag = 'output window, operand 0']
    #allocation3 [shape = 's32[2]{0}', space=sflag, size = 0x8, scoped, tag = 'scoped memory for tpu_custom_call.1']
    %12 = vsyncpa [#allocation3], 0
    %s13 = scalar_lea.sflag [#allocation3], 1
    %14 = vsyncpa %s13, 0
    loop: start=0, step=1, limit=4
    $region2: #{tpu_custom_call.1} parent=1 // loop_pre_header
      _
    $region3: #{tpu_custom_call.1} parent=1 // loop_header
      %s16 = sphi 0, %s20
      %p17 = scmp.ge.s32.totalorder %s16, 4
      %s26 = sphi 0, %s28
      %s29 = sphi 0, %s26
      %s30 = sphi 0, %s29
      %s46 = sphi 0, %s30
      %s50 = sphi 0, %s50
      %s52 = sphi 0, %s50
      %s53 = sphi 0, %s52
      %s67 = sphi 0, %s53
      %s71 = sphi 0, %s71
      %s73 = sphi 0, %s71
      %s74 = sphi 0, %s73
      %s88 = sphi 0, %s74
      %s92 = sphi 0, %s92
      %s94 = sphi 0, %s92
      %s95 = sphi 0, %s94
      %s109 = sphi 0, %s95
      %s113 = sphi 0, %s113
      %s115 = sphi 0, %s113
      %s116 = sphi 0, %s115
      %s130 = sphi 0, %s116
      %s134 = sphi 0, %s134
      %s136 = sphi 0, %s134
      %s137 = sphi 0, %s136
      %s151 = sphi 0, %s137
      %s155 = sphi 0, %s155
      %s157 = sphi 0, %s155
      %s158 = sphi 0, %s157
      %s172 = sphi 0, %s158
      %s178 = sphi 0, %s180
      %s181 = sphi 0, %s178
      %s182 = sphi 0, %s181
      %s198 = sphi 0, %s182
    $region4: #{tpu_custom_call.1} parent=1 // loop_header_branch
      %19 = sbr.rel (%p17) target = $region8
    $region5: #{tpu_custom_call.1} parent=1 // loop_body
      %s21 = ssub.s32 %s16, 1
      %s22 = ssub.s32 %s16, 2
      %s23 = sadd.s32 %s16, 1
      %s24 = ssub.s32 %s16, %s23
      %p25 = scmp.eq.s32.totalorder %s24, 0
      %s27 = sadd.s32 %s26, 1
      %s28 = scalar_select %p25, %s26, %s27
      %p31 = pneg %p25
      %p32 = scmp.eq.s32.totalorder %s16, 1
      %p33 = por %p31, %p32
      %p34 = scmp.ne.s32.totalorder %s26, %s29
      %p35 = scmp.eq.s32.totalorder %s16, 0
      %p36 = por %p34, %p35
      %p37 = scmp.ne.s32.totalorder %s26, %s29
      %p38 = scmp.eq.s32.totalorder %s21, 1
      %p39 = por %p37, %p38
      %p40 = scmp.ne.s32.totalorder %s29, %s30
      %p41 = scmp.eq.s32.totalorder %s21, 0
      %p42 = por %p40, %p41
      %p43 = scmp.ne.s32.totalorder %s29, %s30
      %p44 = scmp.eq.s32.totalorder %s22, 1
      %p45 = por %p43, %p44
      %p47 = scmp.ne.s32.totalorder %s30, %s46
      %p48 = scmp.eq.s32.totalorder %s22, 0
      %p49 = por %p47, %p48
      %s51 = sadd.s32 %s50, 1
      %p54 = scmp.eq.s32.totalorder %s16, 1
      %p55 = scmp.ne.s32.totalorder %s50, %s52
      %p56 = scmp.eq.s32.totalorder %s16, 0
      %p57 = por %p55, %p56
      %p58 = scmp.ne.s32.totalorder %s50, %s52
      %p59 = scmp.eq.s32.totalorder %s21, 1
      %p60 = por %p58, %p59
      %p61 = scmp.ne.s32.totalorder %s52, %s53
      %p62 = scmp.eq.s32.totalorder %s21, 0
      %p63 = por %p61, %p62
      %p64 = scmp.ne.s32.totalorder %s52, %s53
      %p65 = scmp.eq.s32.totalorder %s22, 1
      %p66 = por %p64, %p65
      %p68 = scmp.ne.s32.totalorder %s53, %s67
      %p69 = scmp.eq.s32.totalorder %s22, 0
      %p70 = por %p68, %p69
      %s72 = sadd.s32 %s71, 1
      %p75 = scmp.eq.s32.totalorder %s16, 1
      %p76 = scmp.ne.s32.totalorder %s71, %s73
      %p77 = scmp.eq.s32.totalorder %s16, 0
      %p78 = por %p76, %p77
      %p79 = scmp.ne.s32.totalorder %s71, %s73
      %p80 = scmp.eq.s32.totalorder %s21, 1
      %p81 = por %p79, %p80
      %p82 = scmp.ne.s32.totalorder %s73, %s74
      %p83 = scmp.eq.s32.totalorder %s21, 0
      %p84 = por %p82, %p83
      %p85 = scmp.ne.s32.totalorder %s73, %s74
      %p86 = scmp.eq.s32.totalorder %s22, 1
      %p87 = por %p85, %p86
      %p89 = scmp.ne.s32.totalorder %s74, %s88
      %p90 = scmp.eq.s32.totalorder %s22, 0
      %p91 = por %p89, %p90
      %s93 = sadd.s32 %s92, 1
      %p96 = scmp.eq.s32.totalorder %s16, 1
      %p97 = scmp.ne.s32.totalorder %s92, %s94
      %p98 = scmp.eq.s32.totalorder %s16, 0
      %p99 = por %p97, %p98
      %p100 = scmp.ne.s32.totalorder %s92, %s94
      %p101 = scmp.eq.s32.totalorder %s21, 1
      %p102 = por %p100, %p101
      %p103 = scmp.ne.s32.totalorder %s94, %s95
      %p104 = scmp.eq.s32.totalorder %s21, 0
      %p105 = por %p103, %p104
      %p106 = scmp.ne.s32.totalorder %s94, %s95
      %p107 = scmp.eq.s32.totalorder %s22, 1
      %p108 = por %p106, %p107
      %p110 = scmp.ne.s32.totalorder %s95, %s109
      %p111 = scmp.eq.s32.totalorder %s22, 0
      %p112 = por %p110, %p111
      %s114 = sadd.s32 %s113, 1
      %p117 = scmp.eq.s32.totalorder %s16, 1
      %p118 = scmp.ne.s32.totalorder %s113, %s115
      %p119 = scmp.eq.s32.totalorder %s16, 0
      %p120 = por %p118, %p119
      %p121 = scmp.ne.s32.totalorder %s113, %s115
      %p122 = scmp.eq.s32.totalorder %s21, 1
      %p123 = por %p121, %p122
      %p124 = scmp.ne.s32.totalorder %s115, %s116
      %p125 = scmp.eq.s32.totalorder %s21, 0
      %p126 = por %p124, %p125
      %p127 = scmp.ne.s32.totalorder %s115, %s116
      %p128 = scmp.eq.s32.totalorder %s22, 1
      %p129 = por %p127, %p128
      %p131 = scmp.ne.s32.totalorder %s116, %s130
      %p132 = scmp.eq.s32.totalorder %s22, 0
      %p133 = por %p131, %p132
      %s135 = sadd.s32 %s134, 1
      %p138 = scmp.eq.s32.totalorder %s16, 1
      %p139 = scmp.ne.s32.totalorder %s134, %s136
      %p140 = scmp.eq.s32.totalorder %s16, 0
      %p141 = por %p139, %p140
      %p142 = scmp.ne.s32.totalorder %s134, %s136
      %p143 = scmp.eq.s32.totalorder %s21, 1
      %p144 = por %p142, %p143
      %p145 = scmp.ne.s32.totalorder %s136, %s137
      %p146 = scmp.eq.s32.totalorder %s21, 0
      %p147 = por %p145, %p146
      %p148 = scmp.ne.s32.totalorder %s136, %s137
      %p149 = scmp.eq.s32.totalorder %s22, 1
      %p150 = por %p148, %p149
      %p152 = scmp.ne.s32.totalorder %s137, %s151
      %p153 = scmp.eq.s32.totalorder %s22, 0
      %p154 = por %p152, %p153
      %s156 = sadd.s32 %s155, 1
      %p159 = scmp.eq.s32.totalorder %s16, 1
      %p160 = scmp.ne.s32.totalorder %s155, %s157
      %p161 = scmp.eq.s32.totalorder %s16, 0
      %p162 = por %p160, %p161
      %p163 = scmp.ne.s32.totalorder %s155, %s157
      %p164 = scmp.eq.s32.totalorder %s21, 1
      %p165 = por %p163, %p164
      %p166 = scmp.ne.s32.totalorder %s157, %s158
      %p167 = scmp.eq.s32.totalorder %s21, 0
      %p168 = por %p166, %p167
      %p169 = scmp.ne.s32.totalorder %s157, %s158
      %p170 = scmp.eq.s32.totalorder %s22, 1
      %p171 = por %p169, %p170
      %p173 = scmp.ne.s32.totalorder %s158, %s172
      %p174 = scmp.eq.s32.totalorder %s22, 0
      %p175 = por %p173, %p174
      %s176 = ssub.s32 %s16, %s23
      %p177 = scmp.eq.s32.totalorder %s176, 0
      %s179 = sadd.s32 %s178, 1
      %s180 = scalar_select %p177, %s178, %s179
      %p183 = pneg %p177
      %p184 = scmp.eq.s32.totalorder %s16, 1
      %p185 = por %p183, %p184
      %p186 = scmp.ne.s32.totalorder %s178, %s181
      %p187 = scmp.eq.s32.totalorder %s16, 0
      %p188 = por %p186, %p187
      %p189 = scmp.ne.s32.totalorder %s178, %s181
      %p190 = scmp.eq.s32.totalorder %s21, 1
      %p191 = por %p189, %p190
      %p192 = scmp.ne.s32.totalorder %s181, %s182
      %p193 = scmp.eq.s32.totalorder %s21, 0
      %p194 = por %p192, %p193
      %p195 = scmp.ne.s32.totalorder %s181, %s182
      %p196 = scmp.eq.s32.totalorder %s22, 1
      %p197 = por %p195, %p196
      %p199 = scmp.ne.s32.totalorder %s182, %s198
      %p200 = scmp.eq.s32.totalorder %s22, 0
      %p201 = por %p199, %p200
      %p202 = scmp.le.s32.totalorder 1, %s16
      %p203 = scmp.lt.s32.totalorder %s16, 3
      %p204 = pnand %p202, %p203
      %p205 = pneg %p204
      // Predicated region
      $region9: #{tpu_custom_call.1} parent=5 // pred_check
        _
      $region10: #{tpu_custom_call.1} parent=5 // pred_check_branch
        %207 = sbr.rel (%p204) target = $region12
      $region11: #{tpu_custom_call.1} parent=5 // pred_region
        %s208 = ssub.s32 %s16, 1
        // Predicated region
        $region13: #{tpu_custom_call.1} parent=11 // pred_check
          %p209 = pneg %p63
        $region14: #{tpu_custom_call.1} parent=11 // pred_check_branch
          %211 = sbr.rel (%p209) target = $region16
        $region15: #{tpu_custom_call.1} parent=11 // pred_region
          _
        $region16: #{tpu_custom_call.1} parent=11 // pred_fallthru
          _
        // Predicated region
        $region17: #{tpu_custom_call.1} parent=11 // pred_check
          %p212 = pneg %p84
        $region18: #{tpu_custom_call.1} parent=11 // pred_check_branch
          %214 = sbr.rel (%p212) target = $region20
        $region19: #{tpu_custom_call.1} parent=11 // pred_region
          _
        $region20: #{tpu_custom_call.1} parent=11 // pred_fallthru
          _
        // Predicated region
        $region21: #{tpu_custom_call.1} parent=11 // pred_check
          %p215 = pneg %p105
        $region22: #{tpu_custom_call.1} parent=11 // pred_check_branch
          %217 = sbr.rel (%p215) target = $region24
        $region23: #{tpu_custom_call.1} parent=11 // pred_region
          _
        $region24: #{tpu_custom_call.1} parent=11 // pred_fallthru
          _
        // Predicated region
        $region25: #{tpu_custom_call.1} parent=11 // pred_check
          %p218 = pneg %p126
        $region26: #{tpu_custom_call.1} parent=11 // pred_check_branch
          %220 = sbr.rel (%p218) target = $region28
        $region27: #{tpu_custom_call.1} parent=11 // pred_region
          _
        $region28: #{tpu_custom_call.1} parent=11 // pred_fallthru
          _
        // Predicated region
        $region29: #{tpu_custom_call.1} parent=11 // pred_check
          %p221 = pneg %p147
        $region30: #{tpu_custom_call.1} parent=11 // pred_check_branch
          %223 = sbr.rel (%p221) target = $region32
        $region31: #{tpu_custom_call.1} parent=11 // pred_region
          _
        $region32: #{tpu_custom_call.1} parent=11 // pred_fallthru
          _
        // Predicated region
        $region33: #{tpu_custom_call.1} parent=11 // pred_check
          %p224 = pneg %p168
        $region34: #{tpu_custom_call.1} parent=11 // pred_check_branch
          %226 = sbr.rel (%p224) target = $region36
        $region35: #{tpu_custom_call.1} parent=11 // pred_region
          _
        $region36: #{tpu_custom_call.1} parent=11 // pred_fallthru
          _
      $region12: #{tpu_custom_call.1} parent=5 // pred_fallthru
        _
      %p227 = scmp.lt.s32.totalorder %s16, 2
      // Predicated region
      $region37: #{tpu_custom_call.1} parent=5 // pred_check
        %p228 = pneg %p227
      $region38: #{tpu_custom_call.1} parent=5 // pred_check_branch
        %230 = sbr.rel (%p228) target = $region40
      $region39: #{tpu_custom_call.1} parent=5 // pred_region
        // Predicated region
        $region41: #{tpu_custom_call.1} parent=39 // pred_check
          %p231 = pneg %p36
        $region42: #{tpu_custom_call.1} parent=39 // pred_check_branch
          %233 = sbr.rel (%p231) target = $region44
        $region43: #{tpu_custom_call.1} parent=39 // pred_region
          %s234 = smul.u32 2, %s16
          %p235 = scmp.lt.s32.totalorder %s234, 3
          %s236 = scalar_select %p235, %s234, 3
          %s237 = smul.addr %s236, 2
          %s238 = smul.addr %s237, 4
          %s239 = scalar_lea.vmem %s0, %s238
          %s240 = smul.u32 2, %s16
        $region44: #{tpu_custom_call.1} parent=39 // pred_fallthru
          _
      $region40: #{tpu_custom_call.1} parent=5 // pred_fallthru
        _
      %p241 = scmp.le.s32.totalorder 1, %s16
      %p242 = scmp.lt.s32.totalorder %s16, 3
      %p243 = pnand %p241, %p242
      %p244 = pneg %p243
      // Predicated region
      $region45: #{tpu_custom_call.1} parent=5 // pred_check
        _
      $region46: #{tpu_custom_call.1} parent=5 // pred_check_branch
        %246 = sbr.rel (%p243) target = $region48
      $region47: #{tpu_custom_call.1} parent=5 // pred_region
        %s247 = ssub.s32 %s16, 1
        %s248 = smul.u32 2, %s21
        %p249 = scmp.lt.s32.totalorder %s248, 3
        %s250 = scalar_select %p249, %s248, 3
        %s251 = smul.addr %s250, 2
        %s252 = smul.addr %s251, 4
        %s253 = scalar_lea.vmem %s0, %s252
        %p254 = pneg %p42
        %p255 = pneg %p39
        %p256 = pneg %p63
        %p257 = pneg %p60
        %p258 = pneg %p84
        %p259 = pneg %p81
        %p260 = pneg %p105
        %p261 = pneg %p102
        %p262 = pneg %p126
        %p263 = pneg %p123
        %p264 = pneg %p147
        %p265 = pneg %p144
        %p266 = pneg %p168
        %p267 = pneg %p165
        %p268 = pneg %p194
        %p269 = pneg %p191
        %s270 = sand.u32 %s181, 1
        %s271 = scalar_lea.sflag [#allocation3], %s270
        %s272 = sand.u32 %s181, 1
        %s273 = smul.addr %s272, 2
        %s274 = scalar_lea.vmem [#allocation2], %s273
        %s275 = smul.u32 2, %s21
        %p276 = scmp.lt.s32.totalorder %s275, 3
        %s277 = scalar_select %p276, %s275, 3
        %s278 = smul.addr %s277, 2
        %s279 = smul.addr %s278, 4
        %s280 = scalar_lea.vmem %s0, %s279
        %s281 = smul.u32 2, %s21
        %v283 = vld [vmem:[%s280] sm:$0xf]
        %v284 = vld [vmem:[%s280 + $0x4] sm:$0xf]
        %v285 = vld [vmem:[%s280 + $0x8] sm:$0xf]
        %v286 = vld [vmem:[%s280 + $0xc] sm:$0xf]
        %v291 = vunpack.c.l.b16 %v283
        %v292 = vunpack.c.l.b16 %v284
        %v293 = vunpack.c.l.b16 %v285
        %v294 = vunpack.c.l.b16 %v286
        %v295 = vpack.c.b16 %v292, %v291
        %v296 = vpack.c.b16 %v294, %v293
        %v298 = vshrl.u32 %v295, 16
        %v300 = vrot.slane %v298, 7
        %v301 = vshll.u32 %v295, 16
        %v303 = vor.u32 %v300, %v301
        %v305 = vshrl.u32 %v296, 16
        %v307 = vrot.slane %v305, 7
        %v308 = vshll.u32 %v296, 16
        %v310 = vor.u32 %v307, %v308
        %vm315 = vcmask 1040384
        %vm316 = vsmask.f32 256
        %vm317 = vmand %vm315, %vm316
        %v318 = vsel %vm317, 0, %v303
        %v319 = vsel %vm317, 0, %v310
        %v320 = vsel %vm317, %v300, 0
        %v321 = vsel %vm317, %v307, 0
        %vm322 = vsmask.f32 7424
        %v324 = vshrl.u32 %v318, 16
        %v326 = vshll.u32 %v318, 16
        %v328 = vrot.slane %v326, 1
        %v329 = vor.u32 %v324, %v328
        %v331 = vshll.u32 %v320, 16
        %v333 = vrot.slane %v331, 1
        %v334 = vsel %vm322, %v329, %v333
        %v336 = vshrl.u32 %v319, 16
        %v338 = vshll.u32 %v319, 16
        %v340 = vrot.slane %v338, 1
        %v341 = vor.u32 %v336, %v340
        %v343 = vshll.u32 %v321, 16
        %v345 = vrot.slane %v343, 1
        %v346 = vsel %vm322, %v341, %v345
        %347 = vrot.lane.b32.xlu0 %v334, 4
        %v348 = vpop.permute.xlu0 %347
        %349 = vrot.lane.b32.xlu0 %v346, 4
        %v350 = vpop.permute.xlu0 %349
        %vm355 = vcmask 1046528
        %v356 = vrot.slane %v318, 1
        %v357 = vrot.slane %v320, 1
        %v358 = vsel %vm355, %v356, %v357
        %v359 = vrot.slane %v319, 1
        %v360 = vrot.slane %v321, 1
        %v361 = vsel %vm355, %v359, %v360
        %362 = vrot.lane.b32.xlu0 %v358, 8
        %v363 = vpop.permute.xlu0 %362
        %364 = vrot.lane.b32.xlu0 %v361, 8
        %v365 = vpop.permute.xlu0 %364
        %vm366 = vcmask 31744
        %v368 = vsel %vm366, %v318, %v348
        %v370 = vsel %vm366, %v319, %v350
        %vm371 = vcmask 64512
        %v373 = vsel %vm371, %v368, %v363
        %v375 = vsel %vm371, %v370, %v365
        %v376 = vld [vmem:[%s1] sm:$0xf]
        %v377 = vld [vmem:[%s1 + $0x4] sm:$0x3]
        %v378 = vld [vmem:[%s2] sm:$0x1]
        %v380 = vlaneseq
        %v381 = vshrl.u32 %v380, 7
        %v382 = vsub.s32 0, %v381
        %v383 = vrot.slane %v378, %v382
        %v387 = vunpack.c.l.b16 %v376
        %v388 = vunpack.c.l.b16 %v377
        %v389 = vpack.c.b16 %v388, %v387
        %vm390 = vcmask 97280
        %v391 = vsel %vm390, %v373, 0
        %v393 = vsel %vm390, %v375, 0
        %vm395 = vcmask 1045504
        %v397 = vsel %vm395, %v389, 0
        %399 = vmatprep.subr.bf16.mxu0 0
        %400 = vmatpush1.bf16.msra.mxu0 %v397
        %401 = vmatprep.subr.bf16.mxu0 0
        %402 = vmatpush1.bf16.msra.mxu0 0
        %403 = vmatprep.subr.bf16.mxu0 0
        %404 = vmatpush1.bf16.msra.mxu0 0
        %405 = vmatprep.subr.bf16.mxu0 0
        %406 = vmatpush1.bf16.msra.mxu0 0
        %407 = vmatprep.subr.bf16.mxu0 0
        %408 = vmatpush1.bf16.msra.mxu0 0
        %409 = vmatprep.subr.bf16.mxu0 0
        %410 = vmatpush1.bf16.msra.mxu0 0
        %411 = vmatprep.subr.bf16.mxu0 0
        %412 = vmatpush1.bf16.msra.mxu0 0
        %413 = vmatprep.subr.bf16.mxu0 0
        %414 = vmatpush1.bf16.msra.mxu0 0
        %415 = vmatprep.subr.bf16.mxu0 0
        %416 = vmatpush1.bf16.msra.mxu0 0
        %417 = vmatprep.subr.bf16.mxu0 0
        %418 = vmatpush1.bf16.msra.mxu0 0
        %419 = vmatprep.subr.bf16.mxu0 0
        %420 = vmatpush1.bf16.msra.mxu0 0
        %421 = vmatprep.subr.bf16.mxu0 0
        %422 = vmatpush1.bf16.msra.mxu0 0
        %423 = vmatprep.subr.bf16.mxu0 0
        %424 = vmatpush1.bf16.msra.mxu0 0
        %425 = vmatprep.subr.bf16.mxu0 0
        %426 = vmatpush1.bf16.msra.mxu0 0
        %427 = vmatprep.subr.bf16.mxu0 0
        %428 = vmatpush1.bf16.msra.mxu0 0
        %429 = vmatprep.subr.bf16.mxu0 0
        %430 = vmatpush1.bf16.msra.mxu0 0
        %431 = vmatprep.mubr.bf16.mxu0 0
        %432 = vmatmul.mubr.bf16.gmra.mrb[0].mxu0 %v391
        %v433 = vpop.f32.mrb[0].mxu0
        %v434 = vadd.f32 %v383, %v433
        %v435 = vpop.f32.mrb[0].mxu0
        %v436 = vpop.f32.mrb[0].mxu0
        %v437 = vadd.f32 %v383, %v436
        %v438 = vpop.f32.mrb[0].mxu0
        %439 = vmatprep.mubr.bf16.mxu0 0
        %440 = vmatmul.mubr.bf16.gmra.mrb[0].mxu0 %v393
        %v441 = vpop.f32.mrb[0].mxu0
        %v442 = vadd.f32 %v383, %v441
        %v443 = vpop.f32.mrb[0].mxu0
        %v444 = vpop.f32.mrb[0].mxu0
        %v445 = vadd.f32 %v383, %v444
        %v446 = vpop.f32.mrb[0].mxu0
        %447 = vdwg.mxu0
        %v448 = vmax.f32 %v434, 0.0
        %v449 = vmax.f32 %v437, 0.0
        %v450 = vmax.f32 %v442, 0.0
        %v451 = vmax.f32 %v445, 0.0
        %v452 = vpack.c.bf16 %v449, %v448
        %v453 = vpack.c.bf16 %v451, %v450
        %v456 = vrot.slane %v452, 7
        %v457 = vrot.slane %v453, 7
        %vm458 = vcmask 1040384
        %v461 = vsel %vm458, 0, %v456
        %v463 = vsel %vm458, 0, %v457
        %v464 = vsel %vm458, %v456, 0
        %v465 = vsel %vm458, %v457, 0
        %v466 = vshrl.u32 %v461, 16
        %v468 = vshll.u32 %v461, 16
        %v470 = vrot.slane %v468, 1
        %v471 = vor.u32 %v466, %v470
        %v472 = vshll.u32 %v464, 16
        %v474 = vrot.slane %v472, 1
        %v475 = vsel %vm322, %v471, %v474
        %v476 = vshrl.u32 %v463, 16
        %v478 = vshll.u32 %v463, 16
        %v480 = vrot.slane %v478, 1
        %v481 = vor.u32 %v476, %v480
        %v482 = vshll.u32 %v465, 16
        %v484 = vrot.slane %v482, 1
        %v485 = vsel %vm322, %v481, %v484
        %486 = vrot.lane.b32.xlu0 %v475, 8
        %v487 = vpop.permute.xlu0 %486
        %488 = vrot.lane.b32.xlu0 %v485, 8
        %v489 = vpop.permute.xlu0 %488
        %v494 = vrot.slane %v461, 1
        %v495 = vrot.slane %v464, 1
        %v496 = vsel %vm355, %v494, %v495
        %v497 = vrot.slane %v463, 1
        %v498 = vrot.slane %v465, 1
        %v499 = vsel %vm355, %v497, %v498
        %500 = vrot.lane.b32.xlu0 %v496, 16
        %v501 = vpop.permute.xlu0 %500
        %502 = vrot.lane.b32.xlu0 %v499, 16
        %v503 = vpop.permute.xlu0 %502
        %vm504 = vsmask.f32 6400
        %v505 = vrot.slane %v466, 1
        %v506 = vrot.slane %v468, 2
        %v507 = vor.u32 %v505, %v506
        %v508 = vshrl.u32 %v464, 16
        %v510 = vrot.slane %v508, 1
        %v511 = vrot.slane %v472, 2
        %v512 = vor.u32 %v510, %v511
        %v513 = vsel %vm504, %v507, %v512
        %v514 = vrot.slane %v476, 1
        %v515 = vrot.slane %v478, 2
        %v516 = vor.u32 %v514, %v515
        %v517 = vshrl.u32 %v465, 16
        %v519 = vrot.slane %v517, 1
        %v520 = vrot.slane %v482, 2
        %v521 = vor.u32 %v519, %v520
        %v522 = vsel %vm504, %v516, %v521
        %523 = vrot.lane.b32.xlu0 %v513, 24
        %v524 = vpop.permute.xlu0 %523
        %525 = vrot.lane.b32.xlu0 %v522, 24
        %v526 = vpop.permute.xlu0 %525
        %vm527 = vcmask 1045504
        %v528 = vrot.slane %v461, 2
        %v529 = vrot.slane %v464, 2
        %v530 = vsel %vm527, %v528, %v529
        %v531 = vrot.slane %v463, 2
        %v532 = vrot.slane %v465, 2
        %v533 = vsel %vm527, %v531, %v532
        %534 = vrot.lane.b32.xlu0 %v530, 32
        %v535 = vpop.permute.xlu0 %534
        %536 = vrot.lane.b32.xlu0 %v533, 32
        %v537 = vpop.permute.xlu0 %536
        %v539 = vsel %vm371, %v461, %v487
        %v541 = vsel %vm371, %v463, %v489
        %vm542 = vcmask 130048
        %v544 = vsel %vm542, %v539, %v501
        %v546 = vsel %vm542, %v541, %v503
        %vm547 = vcmask 195584
        %v549 = vsel %vm547, %v544, %v524
        %v551 = vsel %vm547, %v546, %v526
        %vm552 = vcmask 261120
        %v554 = vsel %vm552, %v549, %v535
        %v556 = vsel %vm552, %v551, %v537
        %v557 = vld [vmem:[%s3] sm:$0xf]
        %v558 = vld [vmem:[%s3 + $0x4] sm:$0xf]
        %v559 = vld [vmem:[%s3 + $0x8] sm:$0xf]
        %v560 = vld [vmem:[%s3 + $0xc] sm:$0xf]
        %v561 = vld [vmem:[%s3 + $0x10] sm:$0xf]
        %v562 = vld [vmem:[%s4] sm:$0x1]
        %v564 = vlaneseq
        %v565 = vshrl.u32 %v564, 7
        %v566 = vsub.s32 0, %v565
        %v567 = vrot.slane %v562, %v566
        %v574 = vunpack.c.l.b16 %v557
        %v575 = vunpack.c.l.b16 %v558
        %v576 = vunpack.c.l.b16 %v559
        %v577 = vunpack.c.l.b16 %v560
        %v578 = vunpack.c.l.b16 %v561
        %v579 = vpack.c.b16 %v575, %v574
        %v580 = vpack.c.b16 %v577, %v576
        %v581 = vpack.c.b16 %v578, %v578
        %vm584 = vcmask 326656
        %v585 = vsel %vm584, %v554, 0
        %v587 = vsel %vm584, %v556, 0
        %vm589 = vcmask 1043456
        %v591 = vsel %vm589, %v581, 0
        %593 = vmatprep.subr.bf16.mxu0 0
        %594 = vmatpush1.bf16.msra.mxu0 %v579
        %595 = vmatprep.subr.bf16.mxu0 0
        %596 = vmatpush1.bf16.msra.mxu0 %v580
        %597 = vmatprep.subr.bf16.mxu0 0
        %598 = vmatpush1.bf16.msra.mxu0 %v591
        %599 = vmatprep.subr.bf16.mxu0 0
        %600 = vmatpush1.bf16.msra.mxu0 0
        %601 = vmatprep.subr.bf16.mxu0 0
        %602 = vmatpush1.bf16.msra.mxu0 0
        %603 = vmatprep.subr.bf16.mxu0 0
        %604 = vmatpush1.bf16.msra.mxu0 0
        %605 = vmatprep.subr.bf16.mxu0 0
        %606 = vmatpush1.bf16.msra.mxu0 0
        %607 = vmatprep.subr.bf16.mxu0 0
        %608 = vmatpush1.bf16.msra.mxu0 0
        %609 = vmatprep.subr.bf16.mxu0 0
        %610 = vmatpush1.bf16.msra.mxu0 0
        %611 = vmatprep.subr.bf16.mxu0 0
        %612 = vmatpush1.bf16.msra.mxu0 0
        %613 = vmatprep.subr.bf16.mxu0 0
        %614 = vmatpush1.bf16.msra.mxu0 0
        %615 = vmatprep.subr.bf16.mxu0 0
        %616 = vmatpush1.bf16.msra.mxu0 0
        %617 = vmatprep.subr.bf16.mxu0 0
        %618 = vmatpush1.bf16.msra.mxu0 0
        %619 = vmatprep.subr.bf16.mxu0 0
        %620 = vmatpush1.bf16.msra.mxu0 0
        %621 = vmatprep.subr.bf16.mxu0 0
        %622 = vmatpush1.bf16.msra.mxu0 0
        %623 = vmatprep.subr.bf16.mxu0 0
        %624 = vmatpush1.bf16.msra.mxu0 0
        %625 = vmatprep.mubr.bf16.mxu0 0
        %626 = vmatmul.mubr.bf16.gmra.mrb[0].mxu0 %v585
        %v627 = vpop.f32.mrb[0].mxu0
        %v628 = vadd.f32 %v567, %v627
        %v629 = vpop.f32.mrb[0].mxu0
        %v630 = vpop.f32.mrb[0].mxu0
        %v631 = vadd.f32 %v567, %v630
        %v632 = vpop.f32.mrb[0].mxu0
        %633 = vmatprep.mubr.bf16.mxu0 0
        %634 = vmatmul.mubr.bf16.gmra.mrb[0].mxu0 %v587
        %v635 = vpop.f32.mrb[0].mxu0
        %v636 = vadd.f32 %v567, %v635
        %v637 = vpop.f32.mrb[0].mxu0
        %v638 = vpop.f32.mrb[0].mxu0
        %v639 = vadd.f32 %v567, %v638
        %v640 = vpop.f32.mrb[0].mxu0
        %641 = vdwg.mxu0
        %v642 = vmax.f32 %v628, 0.0
        %v643 = vmax.f32 %v631, 0.0
        %v644 = vmax.f32 %v636, 0.0
        %v645 = vmax.f32 %v639, 0.0
        %v646 = vsel %vm542, %v642, 0.0
        %v647 = vsel %vm542, %v643, 0.0
        %v648 = vadd.f32 %v646, %v647
        %v649 = vrot.slane %v648, 4
        %v650 = vadd.f32 %v648, %v649
        %v651 = vrot.slane %v650, 2
        %v652 = vadd.f32 %v650, %v651
        %v653 = vrot.slane %v652, 1
        %v654 = vadd.f32 %v652, %v653
        %v655 = vsel %vm542, %v644, 0.0
        %v656 = vsel %vm542, %v645, 0.0
        %v657 = vadd.f32 %v655, %v656
        %v658 = vrot.slane %v657, 4
        %v659 = vadd.f32 %v657, %v658
        %v660 = vrot.slane %v659, 2
        %v661 = vadd.f32 %v659, %v660
        %v662 = vrot.slane %v661, 1
        %v663 = vadd.f32 %v661, %v662
        %v664 = vmul.f32 %v654, 0.0625
        %v665 = vmul.f32 %v663, 0.0625
        %v666 = vpack.c.bf16 %v664, %v664
        %v667 = vpack.c.bf16 %v665, %v665
        %v668 = vld [vmem:[%s5] sm:$0xf]
        %v669 = vld [vmem:[%s5 + $0x4] sm:$0xf]
        %v670 = vld [vmem:[%s6] sm:$0x1]
        %v672 = vlaneseq
        %v673 = vshrl.u32 %v672, 7
        %v674 = vsub.s32 0, %v673
        %v675 = vrot.slane %v670, %v674
        %v679 = vunpack.c.l.b16 %v666
        %v680 = vunpack.c.l.b16 %v667
        %vm681 = vcmask 1041409
        %v682 = vsel %vm681, %v680, %v679
        %v683 = vpack.c.b16 %v682, %v682
        %v686 = vunpack.c.l.b16 %v668
        %v687 = vunpack.c.l.b16 %v669
        %v688 = vpack.c.b16 %v687, %v686
        %v691 = vsel %vm542, %v683, 0
        %693 = vmatprep.subr.bf16.mxu0 0
        %694 = vmatpush1.bf16.msra.mxu0 %v688
        %695 = vmatprep.subr.bf16.mxu0 0
        %696 = vmatpush1.bf16.msra.mxu0 0
        %697 = vmatprep.subr.bf16.mxu0 0
        %698 = vmatpush1.bf16.msra.mxu0 0
        %699 = vmatprep.subr.bf16.mxu0 0
        %700 = vmatpush1.bf16.msra.mxu0 0
        %701 = vmatprep.subr.bf16.mxu0 0
        %702 = vmatpush1.bf16.msra.mxu0 0
        %703 = vmatprep.subr.bf16.mxu0 0
        %704 = vmatpush1.bf16.msra.mxu0 0
        %705 = vmatprep.subr.bf16.mxu0 0
        %706 = vmatpush1.bf16.msra.mxu0 0
        %707 = vmatprep.subr.bf16.mxu0 0
        %708 = vmatpush1.bf16.msra.mxu0 0
        %709 = vmatprep.subr.bf16.mxu0 0
        %710 = vmatpush1.bf16.msra.mxu0 0
        %711 = vmatprep.subr.bf16.mxu0 0
        %712 = vmatpush1.bf16.msra.mxu0 0
        %713 = vmatprep.subr.bf16.mxu0 0
        %714 = vmatpush1.bf16.msra.mxu0 0
        %715 = vmatprep.subr.bf16.mxu0 0
        %716 = vmatpush1.bf16.msra.mxu0 0
        %717 = vmatprep.subr.bf16.mxu0 0
        %718 = vmatpush1.bf16.msra.mxu0 0
        %719 = vmatprep.subr.bf16.mxu0 0
        %720 = vmatpush1.bf16.msra.mxu0 0
        %721 = vmatprep.subr.bf16.mxu0 0
        %722 = vmatpush1.bf16.msra.mxu0 0
        %723 = vmatprep.subr.bf16.mxu0 0
        %724 = vmatpush1.bf16.msra.mxu0 0
        %725 = vmatprep.mubr.bf16.mxu0 0
        %726 = vmatmul.mubr.bf16.gmra.mrb[0].mxu0 %v691
        %v727 = vpop.f32.mrb[0].mxu0
        %v728 = vadd.f32 %v675, %v727
        %v729 = vpop.f32.mrb[0].mxu0
        %v730 = vpop.f32.mrb[0].mxu0
        %v731 = vpop.f32.mrb[0].mxu0
        %732 = vdwg.mxu0
        %733 = vst [vmem:[%s274] sm:$0x3] %v728
        %s734 = sand.u32 %s181, 1
        %s735 = scalar_lea.sflag [#allocation3], %s734
        %s736 = sand.u32 %s181, 1
        %s737 = smul.addr %s736, 2
        %s738 = scalar_lea.vmem [#allocation2], %s737
        // Predicated region
        $region49: #{tpu_custom_call.1} parent=47 // pred_check
          %p739 = pneg %p191
        $region50: #{tpu_custom_call.1} parent=47 // pred_check_branch
          %741 = sbr.rel (%p739) target = $region52
        $region51: #{tpu_custom_call.1} parent=47 // pred_region
          %s743 = ssub.s32 32, 32
          %744 = vsyncadd %s735, %s743
          %s745 = smul.addr %s21, 32
          %s746 = scalar_lea.hbm %s7, %s745
          %s748 = sshll.u32 %s738, 4
          %s749 = int_to_ptr.vmem [resolvable:$true] %s748
          %751 = dma.vmem_to_hbm [thread:$0]  %s749, 32, %s746, %s735
        $region52: #{tpu_custom_call.1} parent=47 // pred_fallthru
          _
      $region48: #{tpu_custom_call.1} parent=5 // pred_fallthru
        _
      %p752 = scmp.le.s32.totalorder 2, %s16
      // Predicated region
      $region53: #{tpu_custom_call.1} parent=5 // pred_check
        %p753 = pneg %p752
      $region54: #{tpu_custom_call.1} parent=5 // pred_check_branch
        %755 = sbr.rel (%p753) target = $region56
      $region55: #{tpu_custom_call.1} parent=5 // pred_region
        %s756 = ssub.s32 %s16, 2
        // Predicated region
        $region57: #{tpu_custom_call.1} parent=55 // pred_check
          %p757 = pneg %p197
        $region58: #{tpu_custom_call.1} parent=55 // pred_check_branch
          %759 = sbr.rel (%p757) target = $region60
        $region59: #{tpu_custom_call.1} parent=55 // pred_region
          %s760 = sand.u32 %s182, 1
          %s761 = scalar_lea.sflag [#allocation3], %s760
          %s762 = sand.u32 %s182, 1
          %s763 = smul.addr %s762, 2
          %s764 = scalar_lea.vmem [#allocation2], %s763
          %765 = dma.done %s761, 32
        $region60: #{tpu_custom_call.1} parent=55 // pred_fallthru
          _
      $region56: #{tpu_custom_call.1} parent=5 // pred_fallthru
        _
    $region6: #{tpu_custom_call.1} parent=1 // loop_footer
      %s20 = sadd.s32 1, %s16
    $region7: #{tpu_custom_call.1} parent=1 // loop_footer_branch
      %15 = sbr.rel target = $region3
    $region8: #{tpu_custom_call.1} parent=1 // loop_exit
      _
    %766 = vsyncpa [#allocation3], 1
    %s767 = scalar_lea.sflag [#allocation3], 1
    %768 = vsyncpa %s767, 1

</llo_original>
